<compile_context>
chip_gen: v7x
topology: tpu7x:2x2x1
jax: 0.10.0
libtpu: 0.0.40
codegen_flags: <defaults>
</compile_context>

<pallas_src>
import functools

import jax
import jax.numpy as jnp
from jax.experimental import pallas as pl
from jax.experimental.pallas import tpu as pltpu


# ------------------------------ fused kernel ------------------------------- #

def _fused_kernel(x_ref, w1t_ref, b1_ref, w2t_ref, b2_ref,
                  cb_ref, cbt_ref, csq_ref, w3t_ref, b3_ref, wht_ref, bh_ref,
                  onset_ref, dur_ref, idx_ref, mind_ref,
                  *, apply_sigmoid: bool):
    # x: [P, Wt]  -- features on the sublane axis, time on the lane axis.
    x = x_ref[...].astype(jnp.float32)

    # ---- encoder: per-timestep MLP (pointwise Conv1d == matmul) ----
    h = jnp.dot(w1t_ref[...], x, preferred_element_type=jnp.float32) + b1_ref[...]
    h = jnp.maximum(h, 0.0)                                                   # [H, Wt]
    e = jnp.dot(w2t_ref[...], h, preferred_element_type=jnp.float32) + b2_ref[...]  # [D, Wt]

    # ---- VQ: nearest codebook entry (argmin over K on the sublane axis) ----
    c = cb_ref[...]                                                           # [K, D]
    e_sq = jnp.sum(e * e, axis=0, keepdims=True)                              # [1, Wt]
    d = csq_ref[...] - 2.0 * jnp.dot(c, e, preferred_element_type=jnp.float32) + e_sq  # [K, Wt]
    min_d = jnp.min(d, axis=0, keepdims=True)                                 # [1, Wt]
    K = c.shape[0]
    iota = jax.lax.broadcasted_iota(jnp.int32, d.shape, dimension=0)          # [K, Wt]
    idx = jnp.min(jnp.where(d <= min_d, iota, jnp.int32(K)),
                  axis=0, keepdims=True)                                      # [1, Wt]
    onehot = (iota == idx).astype(jnp.float32)                                # [K, Wt]
    q = jnp.dot(cbt_ref[...], onehot, preferred_element_type=jnp.float32)     # [D, Wt]
    # straight-through estimator: forward value of `quantized` == q

    # ---- decoder: shared hidden + fused (onset ‖ duration) heads ----
    h2 = jnp.dot(w3t_ref[...], q, preferred_element_type=jnp.float32) + b3_ref[...]
    h2 = jnp.maximum(h2, 0.0)                                                 # [H, Wt]
    heads = jnp.dot(wht_ref[...], h2,
                    preferred_element_type=jnp.float32) + bh_ref[...]         # [2P, Wt]
    if apply_sigmoid:                                                         # inference path
        heads = jax.nn.sigmoid(heads)

    P = onset_ref.shape[0]
    onset_ref[...] = heads[:P]
    dur_ref[...] = heads[P:]
    idx_ref[...] = idx
    mind_ref[...] = min_d          # ||e - q||^2 per time step; reduced in wrapper


# -------------------------------- wrapper ---------------------------------- #

def _pick_time_tile(w):
    for t in (2048, 1024, 512, 256, 128):
        if w % t == 0:
            return t
    return w  # small / ragged W: single full-width block


@functools.partial(jax.jit, static_argnames=("inference",))
def autoencoder_forward(x, params, inference=False):
    """x: [B, 1, P, W] (NCHW). Returns ((dec_onset, dec_duration), commit_loss)."""
    B, _, P, W = x.shape
    H = params["w1t"].shape[0]
    D = params["w2t"].shape[0]
    K = params["codebook"].shape[0]

    x3 = x[:, 0].astype(jnp.float32)                          # [B, P, W] (free squeeze)

    # hoisted codebook constants (tiny; fused by XLA, never recomputed per tile)
    cb = params["codebook"]                                   # [K, D]
    cbt = cb.T                                                # [D, K]
    c_sq = jnp.sum(cb * cb, axis=1, keepdims=True)            # [K, 1]

    Wt = _pick_time_tile(W)
    grid = (B, W // Wt)

    w_map = lambda b, wi: (0, 0)                              # VMEM-resident params
    x_spec = pl.BlockSpec((None, P, Wt), lambda b, wi: (b, 0, wi))
    out_pw = pl.BlockSpec((None, P, Wt), lambda b, wi: (b, 0, wi))
    out_1w = pl.BlockSpec((None, 1, Wt), lambda b, wi: (b, 0, wi))

    onset, dur, _idx, min_d = pl.pallas_call(
        functools.partial(_fused_kernel, apply_sigmoid=inference),
        grid=grid,
        in_specs=[
            x_spec,
            pl.BlockSpec((H, P), w_map),        # w1t
            pl.BlockSpec((H, 1), w_map),        # b1
            pl.BlockSpec((D, H), w_map),        # w2t
            pl.BlockSpec((D, 1), w_map),        # b2
            pl.BlockSpec((K, D), w_map),        # codebook
            pl.BlockSpec((D, K), w_map),        # codebook^T (pre-transposed)
            pl.BlockSpec((K, 1), w_map),        # codebook squared norms (hoisted)
            pl.BlockSpec((H, D), w_map),        # w3t
            pl.BlockSpec((H, 1), w_map),        # b3
            pl.BlockSpec((2 * P, H), w_map),    # fused onset‖duration head weight
            pl.BlockSpec((2 * P, 1), w_map),    # fused head bias
        ],
        out_specs=(out_pw, out_pw, out_1w, out_1w),
        out_shape=(
            jax.ShapeDtypeStruct((B, P, W), jnp.float32),     # dec_onset
            jax.ShapeDtypeStruct((B, P, W), jnp.float32),     # dec_duration
            jax.ShapeDtypeStruct((B, 1, W), jnp.int32),       # VQ indices
            jax.ShapeDtypeStruct((B, 1, W), jnp.float32),     # per-step ||e-q||^2
        ),
        compiler_params=pltpu.CompilerParams(
            dimension_semantics=("parallel", "parallel")),
    )(x3, params["w1t"], params["b1"], params["w2t"], params["b2"],
      cb, cbt, c_sq, params["w3t"], params["b3"],
      params["w_heads_t"], params["b_heads"])

    beta = 0.25
    n_elem = B * W * D
    # commitment + codebook term (values coincide in forward): (1 + beta) * mean ||e - q||^2
    commit_loss = (1.0 + beta) * jnp.sum(min_d) / n_elem

    # TODO(synk): forward-only; training requires a custom_vjp through pallas_call
    # (straight-through estimator + separate stop_gradient terms in commit_loss).
    return (onset, dur), commit_loss


def init_params(key, in_features, hidden, latent, codebook_size):
    ks = jax.random.split(key, 5)
    s = 0.1
    return {
        "w1t": s * jax.random.normal(ks[0], (hidden, in_features), jnp.float32),
        "b1": jnp.zeros((hidden, 1), jnp.float32),
        "w2t": s * jax.random.normal(ks[1], (latent, hidden), jnp.float32),
        "b2": jnp.zeros((latent, 1), jnp.float32),
        "codebook": s * jax.random.normal(ks[2], (codebook_size, latent), jnp.float32),
        "w3t": s * jax.random.normal(ks[3], (hidden, latent), jnp.float32),
        "b3": jnp.zeros((hidden, 1), jnp.float32),
        # onset head rows [0:P), duration head rows [P:2P) — fused for lane density
        "w_heads_t": s * jax.random.normal(ks[4], (2 * in_features, hidden), jnp.float32),
        "b_heads": jnp.zeros((2 * in_features, 1), jnp.float32),
    }


if __name__ == "__main__":
    key = jax.random.PRNGKey(0)
    kx, kp = jax.random.split(key)

    B, P, W = 2, 16, 256          # batch, pitch (feature) rows, time steps
    hidden, latent, K = 32, 8, 16

    x = jax.random.uniform(kx, (B, 1, P, W), jnp.float32)     # NCHW input
    params = init_params(kp, P, hidden, latent, K)

    # training path (sigmoid=False)
    (dec_onset, dec_duration), commit_loss = autoencoder_forward(x, params, inference=False)
    jax.block_until_ready((dec_onset, dec_duration, commit_loss))

    # assert_not_nan equivalent (host-side NaN guard, like the PyTorch module)
    if bool(jnp.isnan(dec_onset).any()) or bool(jnp.isnan(dec_duration).any()) \
            or bool(jnp.isnan(commit_loss).any()):
        raise Exception("NaN found in decoder output / commit_loss")
    assert dec_onset.shape == (B, P, W) and dec_duration.shape == (B, P, W)

    # inference path (from_latent): sigmoid fused inside the kernel
    (onset_sig, dur_sig), _ = autoencoder_forward(x, params, inference=True)
    jax.block_until_ready((onset_sig, dur_sig))
    assert bool((onset_sig >= 0.0).all()) and bool((onset_sig <= 1.0).all())

    # TODO(synk): Autoencoder1D internals are not given in the reference; a minimal
    # pointwise-conv (MLP) + VQ architecture matching the observed interface is used.
    print("KERNEL_OK")
</pallas_src>

<mosaic_0001>
module attributes {stable_mosaic.version = 11 : i64} {
  func.func @_fused_kernel(%arg0: i32, %arg1: i32, %arg2: memref<1x16x256xf32, #tpu.memory_space<vmem>>, %arg3: memref<32x16xf32, #tpu.memory_space<vmem>>, %arg4: memref<32x1xf32, #tpu.memory_space<vmem>>, %arg5: memref<8x32xf32, #tpu.memory_space<vmem>>, %arg6: memref<8x1xf32, #tpu.memory_space<vmem>>, %arg7: memref<16x8xf32, #tpu.memory_space<vmem>>, %arg8: memref<8x16xf32, #tpu.memory_space<vmem>>, %arg9: memref<16x1xf32, #tpu.memory_space<vmem>>, %arg10: memref<32x8xf32, #tpu.memory_space<vmem>>, %arg11: memref<32x1xf32, #tpu.memory_space<vmem>>, %arg12: memref<32x32xf32, #tpu.memory_space<vmem>>, %arg13: memref<32x1xf32, #tpu.memory_space<vmem>>, %arg14: memref<1x16x256xf32, #tpu.memory_space<vmem>>, %arg15: memref<1x16x256xf32, #tpu.memory_space<vmem>>, %arg16: memref<1x1x256xi32, #tpu.memory_space<vmem>>, %arg17: memref<1x1x256xf32, #tpu.memory_space<vmem>>) attributes {dimension_semantics = [#tpu.dimension_semantics<parallel>, #tpu.dimension_semantics<parallel>], iteration_bounds = array<i64: 2, 1>, scalar_prefetch = 0 : i64, scratch_operands = 0 : i64, tpu.core_type = #tpu.core_type<tc>, window_params = [{transform_indices = @transform_0, window_bounds = array<i64: 1, 16, 256>}, {pipeline_mode = #tpu.pipeline_mode<synchronous>, transform_indices = @transform_1, window_bounds = array<i64: 32, 16>}, {pipeline_mode = #tpu.pipeline_mode<synchronous>, transform_indices = @transform_2, window_bounds = array<i64: 32, 1>}, {pipeline_mode = #tpu.pipeline_mode<synchronous>, transform_indices = @transform_3, window_bounds = array<i64: 8, 32>}, {pipeline_mode = #tpu.pipeline_mode<synchronous>, transform_indices = @transform_4, window_bounds = array<i64: 8, 1>}, {pipeline_mode = #tpu.pipeline_mode<synchronous>, transform_indices = @transform_5, window_bounds = array<i64: 16, 8>}, {pipeline_mode = #tpu.pipeline_mode<synchronous>, transform_indices = @transform_6, window_bounds = array<i64: 8, 16>}, {pipeline_mode = #tpu.pipeline_mode<synchronous>, transform_indices = @transform_7, window_bounds = array<i64: 16, 1>}, {pipeline_mode = #tpu.pipeline_mode<synchronous>, transform_indices = @transform_8, window_bounds = array<i64: 32, 8>}, {pipeline_mode = #tpu.pipeline_mode<synchronous>, transform_indices = @transform_9, window_bounds = array<i64: 32, 1>}, {pipeline_mode = #tpu.pipeline_mode<synchronous>, transform_indices = @transform_10, window_bounds = array<i64: 32, 32>}, {pipeline_mode = #tpu.pipeline_mode<synchronous>, transform_indices = @transform_11, window_bounds = array<i64: 32, 1>}, {transform_indices = @transform_12, window_bounds = array<i64: 1, 16, 256>}, {transform_indices = @transform_13, window_bounds = array<i64: 1, 16, 256>}, {transform_indices = @transform_14, window_bounds = array<i64: 1, 1, 256>}, {transform_indices = @transform_15, window_bounds = array<i64: 1, 1, 256>}]} {
    %c0 = arith.constant 0 : index
    %c0_0 = arith.constant 0 : index
    %c0_1 = arith.constant 0 : index
    %0 = vector.load %arg2[%c0, %c0_0, %c0_1] : memref<1x16x256xf32, #tpu.memory_space<vmem>>, vector<1x16x256xf32>
    %1 = vector.shape_cast %0 : vector<1x16x256xf32> to vector<16x256xf32>
    %c0_2 = arith.constant 0 : index
    %c0_3 = arith.constant 0 : index
    %2 = vector.load %arg3[%c0_2, %c0_3] : memref<32x16xf32, #tpu.memory_space<vmem>>, vector<32x16xf32>
    %cst = arith.constant dense<0.000000e+00> : vector<32x256xf32>
    %3 = tpu.matmul %2, %1, %cst {dimension_numbers = #tpu.dot_dimension_numbers<[1], [0], [0], [1], [0, 0, 1, 1], [], []>} : vector<32x16xf32>, vector<16x256xf32>, vector<32x256xf32> -> vector<32x256xf32>
    %c0_4 = arith.constant 0 : index
    %c0_5 = arith.constant 0 : index
    %4 = vector.load %arg4[%c0_4, %c0_5] : memref<32x1xf32, #tpu.memory_space<vmem>>, vector<32x1xf32>
    %5 = vector.broadcast %4 : vector<32x1xf32> to vector<32x256xf32>
    %6 = arith.addf %3, %5 : vector<32x256xf32>
    %cst_6 = arith.constant 0.000000e+00 : f32
    %7 = vector.broadcast %cst_6 : f32 to vector<32x256xf32>
    %8 = arith.maximumf %6, %7 : vector<32x256xf32>
    %c0_7 = arith.constant 0 : index
    %c0_8 = arith.constant 0 : index
    %9 = vector.load %arg5[%c0_7, %c0_8] : memref<8x32xf32, #tpu.memory_space<vmem>>, vector<8x32xf32>
    %cst_9 = arith.constant dense<0.000000e+00> : vector<8x256xf32>
    %10 = tpu.matmul %9, %8, %cst_9 {dimension_numbers = #tpu.dot_dimension_numbers<[1], [0], [0], [1], [0, 0, 1, 1], [], []>} : vector<8x32xf32>, vector<32x256xf32>, vector<8x256xf32> -> vector<8x256xf32>
    %c0_10 = arith.constant 0 : index
    %c0_11 = arith.constant 0 : index
    %11 = vector.load %arg6[%c0_10, %c0_11] : memref<8x1xf32, #tpu.memory_space<vmem>>, vector<8x1xf32>
    %12 = vector.broadcast %11 : vector<8x1xf32> to vector<8x256xf32>
    %13 = arith.addf %10, %12 : vector<8x256xf32>
    %c0_12 = arith.constant 0 : index
    %c0_13 = arith.constant 0 : index
    %14 = vector.load %arg7[%c0_12, %c0_13] : memref<16x8xf32, #tpu.memory_space<vmem>>, vector<16x8xf32>
    %15 = arith.mulf %13, %13 : vector<8x256xf32>
    %cst_14 = arith.constant dense<0.000000e+00> : vector<256xf32>
    %16 = vector.multi_reduction <add>, %15, %cst_14 [0] : vector<8x256xf32> to vector<256xf32>
    %17 = vector.shape_cast %16 : vector<256xf32> to vector<1x256xf32>
    %c0_15 = arith.constant 0 : index
    %c0_16 = arith.constant 0 : index
    %18 = vector.load %arg9[%c0_15, %c0_16] : memref<16x1xf32, #tpu.memory_space<vmem>>, vector<16x1xf32>
    %cst_17 = arith.constant dense<0.000000e+00> : vector<16x256xf32>
    %19 = tpu.matmul %14, %13, %cst_17 {dimension_numbers = #tpu.dot_dimension_numbers<[1], [0], [0], [1], [0, 0, 1, 1], [], []>} : vector<16x8xf32>, vector<8x256xf32>, vector<16x256xf32> -> vector<16x256xf32>
    %cst_18 = arith.constant 2.000000e+00 : f32
    %20 = vector.broadcast %cst_18 : f32 to vector<16x256xf32>
    %21 = arith.mulf %20, %19 : vector<16x256xf32>
    %22 = vector.broadcast %18 : vector<16x1xf32> to vector<16x256xf32>
    %23 = arith.subf %22, %21 : vector<16x256xf32>
    %24 = vector.broadcast %17 : vector<1x256xf32> to vector<16x256xf32>
    %25 = arith.addf %23, %24 : vector<16x256xf32>
    %cst_19 = arith.constant dense<0x7F800000> : vector<256xf32>
    %26 = vector.multi_reduction <minimumf>, %25, %cst_19 [0] : vector<16x256xf32> to vector<256xf32>
    %27 = vector.shape_cast %26 : vector<256xf32> to vector<1x256xf32>
    %28 = tpu.iota {dimensions = array<i32: 0>} : vector<16x256xi32>
    %29 = vector.broadcast %27 : vector<1x256xf32> to vector<16x256xf32>
    %30 = arith.cmpf ole, %25, %29 : vector<16x256xf32>
    %c16_i32 = arith.constant 16 : i32
    %31 = vector.broadcast %c16_i32 : i32 to vector<16x256xi32>
    %32 = arith.select %30, %28, %31 : vector<16x256xi1>, vector<16x256xi32>
    %cst_20 = arith.constant dense<2147483647> : vector<256xi32>
    %33 = vector.multi_reduction <minsi>, %32, %cst_20 [0] : vector<16x256xi32> to vector<256xi32>
    %34 = vector.shape_cast %33 : vector<256xi32> to vector<1x256xi32>
    %35 = vector.broadcast %34 : vector<1x256xi32> to vector<16x256xi32>
    %36 = arith.cmpi eq, %28, %35 : vector<16x256xi32>
    %37 = arith.extui %36 : vector<16x256xi1> to vector<16x256xi32>
    %38 = arith.sitofp %37 : vector<16x256xi32> to vector<16x256xf32>
    %c0_21 = arith.constant 0 : index
    %c0_22 = arith.constant 0 : index
    %39 = vector.load %arg8[%c0_21, %c0_22] : memref<8x16xf32, #tpu.memory_space<vmem>>, vector<8x16xf32>
    %cst_23 = arith.constant dense<0.000000e+00> : vector<8x256xf32>
    %40 = tpu.matmul %39, %38, %cst_23 {dimension_numbers = #tpu.dot_dimension_numbers<[1], [0], [0], [1], [0, 0, 1, 1], [], []>} : vector<8x16xf32>, vector<16x256xf32>, vector<8x256xf32> -> vector<8x256xf32>
    %c0_24 = arith.constant 0 : index
    %c0_25 = arith.constant 0 : index
    %41 = vector.load %arg10[%c0_24, %c0_25] : memref<32x8xf32, #tpu.memory_space<vmem>>, vector<32x8xf32>
    %cst_26 = arith.constant dense<0.000000e+00> : vector<32x256xf32>
    %42 = tpu.matmul %41, %40, %cst_26 {dimension_numbers = #tpu.dot_dimension_numbers<[1], [0], [0], [1], [0, 0, 1, 1], [], []>} : vector<32x8xf32>, vector<8x256xf32>, vector<32x256xf32> -> vector<32x256xf32>
    %c0_27 = arith.constant 0 : index
    %c0_28 = arith.constant 0 : index
    %43 = vector.load %arg11[%c0_27, %c0_28] : memref<32x1xf32, #tpu.memory_space<vmem>>, vector<32x1xf32>
    %44 = vector.broadcast %43 : vector<32x1xf32> to vector<32x256xf32>
    %45 = arith.addf %42, %44 : vector<32x256xf32>
    %cst_29 = arith.constant 0.000000e+00 : f32
    %46 = vector.broadcast %cst_29 : f32 to vector<32x256xf32>
    %47 = arith.maximumf %45, %46 : vector<32x256xf32>
    %c0_30 = arith.constant 0 : index
    %c0_31 = arith.constant 0 : index
    %48 = vector.load %arg12[%c0_30, %c0_31] : memref<32x32xf32, #tpu.memory_space<vmem>>, vector<32x32xf32>
    %cst_32 = arith.constant dense<0.000000e+00> : vector<32x256xf32>
    %49 = tpu.matmul %48, %47, %cst_32 {dimension_numbers = #tpu.dot_dimension_numbers<[1], [0], [0], [1], [0, 0, 1, 1], [], []>} : vector<32x32xf32>, vector<32x256xf32>, vector<32x256xf32> -> vector<32x256xf32>
    %c0_33 = arith.constant 0 : index
    %c0_34 = arith.constant 0 : index
    %50 = vector.load %arg13[%c0_33, %c0_34] : memref<32x1xf32, #tpu.memory_space<vmem>>, vector<32x1xf32>
    %51 = vector.broadcast %50 : vector<32x1xf32> to vector<32x256xf32>
    %52 = arith.addf %49, %51 : vector<32x256xf32>
    %53 = vector.extract_strided_slice %52 {offsets = [0, 0], sizes = [16, 256], strides = [1, 1]} : vector<32x256xf32> to vector<16x256xf32>
    %c0_35 = arith.constant 0 : index
    %c0_36 = arith.constant 0 : index
    %c0_37 = arith.constant 0 : index
    %54 = vector.load %arg14[%c0_35, %c0_36, %c0_37] : memref<1x16x256xf32, #tpu.memory_space<vmem>>, vector<1x16x256xf32>
    %55 = vector.shape_cast %54 : vector<1x16x256xf32> to vector<16x256xf32>
    %56 = vector.shape_cast %53 : vector<16x256xf32> to vector<1x16x256xf32>
    tpu.vector_store %arg14[%c0_35, %c0_36, %c0_37], %56 {strides = array<i32>} : memref<1x16x256xf32, #tpu.memory_space<vmem>>, vector<1x16x256xf32>,
    %57 = vector.extract_strided_slice %52 {offsets = [16, 0], sizes = [16, 256], strides = [1, 1]} : vector<32x256xf32> to vector<16x256xf32>
    %c0_38 = arith.constant 0 : index
    %c0_39 = arith.constant 0 : index
    %c0_40 = arith.constant 0 : index
    %58 = vector.load %arg15[%c0_38, %c0_39, %c0_40] : memref<1x16x256xf32, #tpu.memory_space<vmem>>, vector<1x16x256xf32>
    %59 = vector.shape_cast %58 : vector<1x16x256xf32> to vector<16x256xf32>
    %60 = vector.shape_cast %57 : vector<16x256xf32> to vector<1x16x256xf32>
    tpu.vector_store %arg15[%c0_38, %c0_39, %c0_40], %60 {strides = array<i32>} : memref<1x16x256xf32, #tpu.memory_space<vmem>>, vector<1x16x256xf32>,
    %c0_41 = arith.constant 0 : index
    %c0_42 = arith.constant 0 : index
    %c0_43 = arith.constant 0 : index
    %61 = vector.load %arg16[%c0_41, %c0_42, %c0_43] : memref<1x1x256xi32, #tpu.memory_space<vmem>>, vector<1x1x256xi32>
    %62 = vector.shape_cast %61 : vector<1x1x256xi32> to vector<1x256xi32>
    %63 = vector.shape_cast %34 : vector<1x256xi32> to vector<1x1x256xi32>
    tpu.vector_store %arg16[%c0_41, %c0_42, %c0_43], %63 {strides = array<i32>} : memref<1x1x256xi32, #tpu.memory_space<vmem>>, vector<1x1x256xi32>,
    %c0_44 = arith.constant 0 : index
    %c0_45 = arith.constant 0 : index
    %c0_46 = arith.constant 0 : index
    %64 = vector.load %arg17[%c0_44, %c0_45, %c0_46] : memref<1x1x256xf32, #tpu.memory_space<vmem>>, vector<1x1x256xf32>
    %65 = vector.shape_cast %64 : vector<1x1x256xf32> to vector<1x256xf32>
    %66 = vector.shape_cast %27 : vector<1x256xf32> to vector<1x1x256xf32>
    tpu.vector_store %arg17[%c0_44, %c0_45, %c0_46], %66 {strides = array<i32>} : memref<1x1x256xf32, #tpu.memory_space<vmem>>, vector<1x1x256xf32>,
    return
  }
  func.func @transform_0(%arg0: i32, %arg1: i32) -> (i32, i32, i32) {
    %c0_i32 = arith.constant 0 : i32
    %c0_i32_0 = arith.constant 0 : i32
    return %arg0, %c0_i32, %arg1 : i32, i32, i32
  }
  func.func @transform_1(%arg0: i32, %arg1: i32) -> (i32, i32) {
    %c0_i32 = arith.constant 0 : i32
    %c0_i32_0 = arith.constant 0 : i32
    %c0_i32_1 = arith.constant 0 : i32
    return %c0_i32, %c0_i32_0 : i32, i32
  }
  func.func @transform_2(%arg0: i32, %arg1: i32) -> (i32, i32) {
    %c0_i32 = arith.constant 0 : i32
    %c0_i32_0 = arith.constant 0 : i32
    %c0_i32_1 = arith.constant 0 : i32
    return %c0_i32, %c0_i32_0 : i32, i32
  }
  func.func @transform_3(%arg0: i32, %arg1: i32) -> (i32, i32) {
    %c0_i32 = arith.constant 0 : i32
    %c0_i32_0 = arith.constant 0 : i32
    %c0_i32_1 = arith.constant 0 : i32
    return %c0_i32, %c0_i32_0 : i32, i32
  }
  func.func @transform_4(%arg0: i32, %arg1: i32) -> (i32, i32) {
    %c0_i32 = arith.constant 0 : i32
    %c0_i32_0 = arith.constant 0 : i32
    %c0_i32_1 = arith.constant 0 : i32
    return %c0_i32, %c0_i32_0 : i32, i32
  }
  func.func @transform_5(%arg0: i32, %arg1: i32) -> (i32, i32) {
    %c0_i32 = arith.constant 0 : i32
    %c0_i32_0 = arith.constant 0 : i32
    %c0_i32_1 = arith.constant 0 : i32
    return %c0_i32, %c0_i32_0 : i32, i32
  }
  func.func @transform_6(%arg0: i32, %arg1: i32) -> (i32, i32) {
    %c0_i32 = arith.constant 0 : i32
    %c0_i32_0 = arith.constant 0 : i32
    %c0_i32_1 = arith.constant 0 : i32
    return %c0_i32, %c0_i32_0 : i32, i32
  }
  func.func @transform_7(%arg0: i32, %arg1: i32) -> (i32, i32) {
    %c0_i32 = arith.constant 0 : i32
    %c0_i32_0 = arith.constant 0 : i32
    %c0_i32_1 = arith.constant 0 : i32
    return %c0_i32, %c0_i32_0 : i32, i32
  }
  func.func @transform_8(%arg0: i32, %arg1: i32) -> (i32, i32) {
    %c0_i32 = arith.constant 0 : i32
    %c0_i32_0 = arith.constant 0 : i32
    %c0_i32_1 = arith.constant 0 : i32
    return %c0_i32, %c0_i32_0 : i32, i32
  }
  func.func @transform_9(%arg0: i32, %arg1: i32) -> (i32, i32) {
    %c0_i32 = arith.constant 0 : i32
    %c0_i32_0 = arith.constant 0 : i32
    %c0_i32_1 = arith.constant 0 : i32
    return %c0_i32, %c0_i32_0 : i32, i32
  }
  func.func @transform_10(%arg0: i32, %arg1: i32) -> (i32, i32) {
    %c0_i32 = arith.constant 0 : i32
    %c0_i32_0 = arith.constant 0 : i32
    %c0_i32_1 = arith.constant 0 : i32
    return %c0_i32, %c0_i32_0 : i32, i32
  }
  func.func @transform_11(%arg0: i32, %arg1: i32) -> (i32, i32) {
    %c0_i32 = arith.constant 0 : i32
    %c0_i32_0 = arith.constant 0 : i32
    %c0_i32_1 = arith.constant 0 : i32
    return %c0_i32, %c0_i32_0 : i32, i32
  }
  func.func @transform_12(%arg0: i32, %arg1: i32) -> (i32, i32, i32) {
    %c0_i32 = arith.constant 0 : i32
    %c0_i32_0 = arith.constant 0 : i32
    return %arg0, %c0_i32, %arg1 : i32, i32, i32
  }
  func.func @transform_13(%arg0: i32, %arg1: i32) -> (i32, i32, i32) {
    %c0_i32 = arith.constant 0 : i32
    %c0_i32_0 = arith.constant 0 : i32
    return %arg0, %c0_i32, %arg1 : i32, i32, i32
  }
  func.func @transform_14(%arg0: i32, %arg1: i32) -> (i32, i32, i32) {
    %c0_i32 = arith.constant 0 : i32
    %c0_i32_0 = arith.constant 0 : i32
    return %arg0, %c0_i32, %arg1 : i32, i32, i32
  }
  func.func @transform_15(%arg0: i32, %arg1: i32) -> (i32, i32, i32) {
    %c0_i32 = arith.constant 0 : i32
    %c0_i32_0 = arith.constant 0 : i32
    return %arg0, %c0_i32, %arg1 : i32, i32, i32
  }
}

</mosaic_0001>

<llo_original>
// kernel: autoencoder_forward.1
$region0: #{autoencoder_forward.1}
  #allocation0 [shape = 'u32[]', space=smem, size = 0x4, offset = 0x4, fixed_abs, tag = 'smem constant byte address 0x4 - core index']
  #allocation1 [shape = 'u32[144,128]{1,0:T(1,128)}', space=vmem, size = 0x12000, scoped, tag = 'internal scratch']
  %s0 = inlined_call_operand.vmem [shape: f32[2,16,256], index: 0, kind: input, shape index: {}]
  %s1 = inlined_call_operand.vmem [shape: f32[32,16], index: 1, kind: input, shape index: {}]
  %s2 = inlined_call_operand.vmem [shape: f32[32,1], index: 2, kind: input, shape index: {}]
  %s3 = inlined_call_operand.vmem [shape: f32[8,32], index: 3, kind: input, shape index: {}]
  %s4 = inlined_call_operand.vmem [shape: f32[8,1], index: 4, kind: input, shape index: {}]
  %s5 = inlined_call_operand.vmem [shape: f32[16,8], index: 5, kind: input, shape index: {}]
  %s6 = inlined_call_operand.vmem [shape: f32[8,16], index: 6, kind: input, shape index: {}]
  %s7 = inlined_call_operand.vmem [shape: f32[16,1], index: 7, kind: input, shape index: {}]
  %s8 = inlined_call_operand.vmem [shape: f32[32,8], index: 8, kind: input, shape index: {}]
  %s9 = inlined_call_operand.vmem [shape: f32[32,1], index: 9, kind: input, shape index: {}]
  %s10 = inlined_call_operand.vmem [shape: f32[32,32], index: 10, kind: input, shape index: {}]
  %s11 = inlined_call_operand.vmem [shape: f32[32,1], index: 11, kind: input, shape index: {}]
  %s12 = inlined_call_operand.hbm [shape: f32[2,16,256], index: 12, kind: output, shape index: {0}]
  %s13 = inlined_call_operand.hbm [shape: f32[2,16,256], index: 13, kind: output, shape index: {1}]
  %s14 = inlined_call_operand.hbm [shape: s32[2,1,256], index: 14, kind: output, shape index: {2}]
  %s15 = inlined_call_operand.vmem [shape: f32[2,1,256], index: 15, kind: output, shape index: {3}]
  %16 = xla_tuple %s12, %s13, %s14, %s15
  %s17 = sld [smem:[#allocation0]]
  $region105: #{autoencoder_forward.1} parent=0
    _
  %s19 = ssub.s32 1, %s17
  %s20 = scalar_select 0, %s19, %s17
  $region1: #{autoencoder_forward.1} parent=0
    #allocation2 [shape = 'u8[32768]{0}', space=vmem, size = 0x8000, scoped, tag = 'output window, operand 0']
    #allocation3 [shape = 's32[2]{0}', space=sflag, size = 0x8, scoped, tag = 'scoped memory for autoencoder_forward.1']
    #allocation4 [shape = 'u8[32768]{0}', space=vmem, size = 0x8000, scoped, tag = 'output window, operand 1']
    #allocation5 [shape = 's32[2]{0}', space=sflag, size = 0x8, scoped, tag = 'scoped memory for autoencoder_forward.1']
    #allocation6 [shape = 'u8[2048]{0}', space=vmem, size = 0x800, scoped, tag = 'output window, operand 2']
    %21 = vsyncpa [#allocation3], 0
    %s22 = scalar_lea.sflag [#allocation3], 1
    %23 = vsyncpa %s22, 0
    %24 = vsyncpa [#allocation5], 0
    %s25 = scalar_lea.sflag [#allocation5], 1
    %26 = vsyncpa %s25, 0
    loop: start=0, step=1, limit=4
    $region2: #{autoencoder_forward.1} parent=1 // loop_pre_header
      _
    $region3: #{autoencoder_forward.1} parent=1 // loop_header
      %s28 = sphi 0, %s32
      %p29 = scmp.ge.s32.totalorder %s28, 4
      %s35 = sphi 0, %s47
      %s36 = sphi 0, %s43
      %s37 = sphi 0, %s35
      %s38 = sphi 0, %s36
      %s39 = sphi 0, %s37
      %s40 = sphi 0, %s38
      %s52 = sphi 0, %s54
      %s55 = sphi 0, %s52
      %s56 = sphi 0, %s55
      %s72 = sphi 0, %s56
      %s76 = sphi 0, %s76
      %s78 = sphi 0, %s76
      %s79 = sphi 0, %s78
      %s93 = sphi 0, %s79
      %s97 = sphi 0, %s97
      %s99 = sphi 0, %s97
      %s100 = sphi 0, %s99
      %s114 = sphi 0, %s100
      %s118 = sphi 0, %s118
      %s120 = sphi 0, %s118
      %s121 = sphi 0, %s120
      %s135 = sphi 0, %s121
      %s139 = sphi 0, %s139
      %s141 = sphi 0, %s139
      %s142 = sphi 0, %s141
      %s156 = sphi 0, %s142
      %s160 = sphi 0, %s160
      %s162 = sphi 0, %s160
      %s163 = sphi 0, %s162
      %s177 = sphi 0, %s163
      %s181 = sphi 0, %s181
      %s183 = sphi 0, %s181
      %s184 = sphi 0, %s183
      %s198 = sphi 0, %s184
      %s202 = sphi 0, %s202
      %s204 = sphi 0, %s202
      %s205 = sphi 0, %s204
      %s219 = sphi 0, %s205
      %s223 = sphi 0, %s223
      %s225 = sphi 0, %s223
      %s226 = sphi 0, %s225
      %s240 = sphi 0, %s226
      %s244 = sphi 0, %s244
      %s246 = sphi 0, %s244
      %s247 = sphi 0, %s246
      %s261 = sphi 0, %s247
      %s265 = sphi 0, %s265
      %s267 = sphi 0, %s265
      %s268 = sphi 0, %s267
      %s282 = sphi 0, %s268
      %s286 = sphi 0, %s286
      %s288 = sphi 0, %s286
      %s289 = sphi 0, %s288
      %s303 = sphi 0, %s289
      %s311 = sphi 0, %s313
      %s314 = sphi 0, %s311
      %s315 = sphi 0, %s314
      %s331 = sphi 0, %s315
      %s339 = sphi 0, %s341
      %s342 = sphi 0, %s339
      %s343 = sphi 0, %s342
      %s359 = sphi 0, %s343
      %s367 = sphi 0, %s369
      %s370 = sphi 0, %s367
      %s371 = sphi 0, %s370
      %s387 = sphi 0, %s371
      %s395 = sphi 0, %s397
      %s398 = sphi 0, %s395
      %s399 = sphi 0, %s398
      %s415 = sphi 0, %s399
    $region4: #{autoencoder_forward.1} parent=1 // loop_header_branch
      %31 = sbr.rel (%p29) target = $region8
    $region5: #{autoencoder_forward.1} parent=1 // loop_body
      %s33 = ssub.s32 %s28, 1
      %s34 = ssub.s32 %s28, 2
      %s41 = sadd.s32 1, %s36
      %p42 = scmp.ge.s32.totalorder %s41, 1
      %s43 = scalar_select %p42, 0, %s41
      %s44 = sadd.s32 1, %s35
      %s45 = scalar_select %p42, %s44, %s35
      %p46 = scmp.ge.s32.totalorder %s45, 2
      %s47 = scalar_select %p46, 0, %s45
      %s48 = ssub.s32 %s35, %s47
      %s49 = ssub.s32 %s36, %s43
      %s50 = sor.u32 %s48, %s49
      %p51 = scmp.eq.s32.totalorder %s50, 0
      %s53 = sadd.s32 %s52, 1
      %s54 = scalar_select %p51, %s52, %s53
      %p57 = pneg %p51
      %p58 = scmp.eq.s32.totalorder %s28, 1
      %p59 = por %p57, %p58
      %p60 = scmp.ne.s32.totalorder %s52, %s55
      %p61 = scmp.eq.s32.totalorder %s28, 0
      %p62 = por %p60, %p61
      %p63 = scmp.ne.s32.totalorder %s52, %s55
      %p64 = scmp.eq.s32.totalorder %s33, 1
      %p65 = por %p63, %p64
      %p66 = scmp.ne.s32.totalorder %s55, %s56
      %p67 = scmp.eq.s32.totalorder %s33, 0
      %p68 = por %p66, %p67
      %p69 = scmp.ne.s32.totalorder %s55, %s56
      %p70 = scmp.eq.s32.totalorder %s34, 1
      %p71 = por %p69, %p70
      %p73 = scmp.ne.s32.totalorder %s56, %s72
      %p74 = scmp.eq.s32.totalorder %s34, 0
      %p75 = por %p73, %p74
      %s77 = sadd.s32 %s76, 1
      %p80 = scmp.eq.s32.totalorder %s28, 1
      %p81 = scmp.ne.s32.totalorder %s76, %s78
      %p82 = scmp.eq.s32.totalorder %s28, 0
      %p83 = por %p81, %p82
      %p84 = scmp.ne.s32.totalorder %s76, %s78
      %p85 = scmp.eq.s32.totalorder %s33, 1
      %p86 = por %p84, %p85
      %p87 = scmp.ne.s32.totalorder %s78, %s79
      %p88 = scmp.eq.s32.totalorder %s33, 0
      %p89 = por %p87, %p88
      %p90 = scmp.ne.s32.totalorder %s78, %s79
      %p91 = scmp.eq.s32.totalorder %s34, 1
      %p92 = por %p90, %p91
      %p94 = scmp.ne.s32.totalorder %s79, %s93
      %p95 = scmp.eq.s32.totalorder %s34, 0
      %p96 = por %p94, %p95
      %s98 = sadd.s32 %s97, 1
      %p101 = scmp.eq.s32.totalorder %s28, 1
      %p102 = scmp.ne.s32.totalorder %s97, %s99
      %p103 = scmp.eq.s32.totalorder %s28, 0
      %p104 = por %p102, %p103
      %p105 = scmp.ne.s32.totalorder %s97, %s99
      %p106 = scmp.eq.s32.totalorder %s33, 1
      %p107 = por %p105, %p106
      %p108 = scmp.ne.s32.totalorder %s99, %s100
      %p109 = scmp.eq.s32.totalorder %s33, 0
      %p110 = por %p108, %p109
      %p111 = scmp.ne.s32.totalorder %s99, %s100
      %p112 = scmp.eq.s32.totalorder %s34, 1
      %p113 = por %p111, %p112
      %p115 = scmp.ne.s32.totalorder %s100, %s114
      %p116 = scmp.eq.s32.totalorder %s34, 0
      %p117 = por %p115, %p116
      %s119 = sadd.s32 %s118, 1
      %p122 = scmp.eq.s32.totalorder %s28, 1
      %p123 = scmp.ne.s32.totalorder %s118, %s120
      %p124 = scmp.eq.s32.totalorder %s28, 0
      %p125 = por %p123, %p124
      %p126 = scmp.ne.s32.totalorder %s118, %s120
      %p127 = scmp.eq.s32.totalorder %s33, 1
      %p128 = por %p126, %p127
      %p129 = scmp.ne.s32.totalorder %s120, %s121
      %p130 = scmp.eq.s32.totalorder %s33, 0
      %p131 = por %p129, %p130
      %p132 = scmp.ne.s32.totalorder %s120, %s121
      %p133 = scmp.eq.s32.totalorder %s34, 1
      %p134 = por %p132, %p133
      %p136 = scmp.ne.s32.totalorder %s121, %s135
      %p137 = scmp.eq.s32.totalorder %s34, 0
      %p138 = por %p136, %p137
      %s140 = sadd.s32 %s139, 1
      %p143 = scmp.eq.s32.totalorder %s28, 1
      %p144 = scmp.ne.s32.totalorder %s139, %s141
      %p145 = scmp.eq.s32.totalorder %s28, 0
      %p146 = por %p144, %p145
      %p147 = scmp.ne.s32.totalorder %s139, %s141
      %p148 = scmp.eq.s32.totalorder %s33, 1
      %p149 = por %p147, %p148
      %p150 = scmp.ne.s32.totalorder %s141, %s142
      %p151 = scmp.eq.s32.totalorder %s33, 0
      %p152 = por %p150, %p151
      %p153 = scmp.ne.s32.totalorder %s141, %s142
      %p154 = scmp.eq.s32.totalorder %s34, 1
      %p155 = por %p153, %p154
      %p157 = scmp.ne.s32.totalorder %s142, %s156
      %p158 = scmp.eq.s32.totalorder %s34, 0
      %p159 = por %p157, %p158
      %s161 = sadd.s32 %s160, 1
      %p164 = scmp.eq.s32.totalorder %s28, 1
      %p165 = scmp.ne.s32.totalorder %s160, %s162
      %p166 = scmp.eq.s32.totalorder %s28, 0
      %p167 = por %p165, %p166
      %p168 = scmp.ne.s32.totalorder %s160, %s162
      %p169 = scmp.eq.s32.totalorder %s33, 1
      %p170 = por %p168, %p169
      %p171 = scmp.ne.s32.totalorder %s162, %s163
      %p172 = scmp.eq.s32.totalorder %s33, 0
      %p173 = por %p171, %p172
      %p174 = scmp.ne.s32.totalorder %s162, %s163
      %p175 = scmp.eq.s32.totalorder %s34, 1
      %p176 = por %p174, %p175
      %p178 = scmp.ne.s32.totalorder %s163, %s177
      %p179 = scmp.eq.s32.totalorder %s34, 0
      %p180 = por %p178, %p179
      %s182 = sadd.s32 %s181, 1
      %p185 = scmp.eq.s32.totalorder %s28, 1
      %p186 = scmp.ne.s32.totalorder %s181, %s183
      %p187 = scmp.eq.s32.totalorder %s28, 0
      %p188 = por %p186, %p187
      %p189 = scmp.ne.s32.totalorder %s181, %s183
      %p190 = scmp.eq.s32.totalorder %s33, 1
      %p191 = por %p189, %p190
      %p192 = scmp.ne.s32.totalorder %s183, %s184
      %p193 = scmp.eq.s32.totalorder %s33, 0
      %p194 = por %p192, %p193
      %p195 = scmp.ne.s32.totalorder %s183, %s184
      %p196 = scmp.eq.s32.totalorder %s34, 1
      %p197 = por %p195, %p196
      %p199 = scmp.ne.s32.totalorder %s184, %s198
      %p200 = scmp.eq.s32.totalorder %s34, 0
      %p201 = por %p199, %p200
      %s203 = sadd.s32 %s202, 1
      %p206 = scmp.eq.s32.totalorder %s28, 1
      %p207 = scmp.ne.s32.totalorder %s202, %s204
      %p208 = scmp.eq.s32.totalorder %s28, 0
      %p209 = por %p207, %p208
      %p210 = scmp.ne.s32.totalorder %s202, %s204
      %p211 = scmp.eq.s32.totalorder %s33, 1
      %p212 = por %p210, %p211
      %p213 = scmp.ne.s32.totalorder %s204, %s205
      %p214 = scmp.eq.s32.totalorder %s33, 0
      %p215 = por %p213, %p214
      %p216 = scmp.ne.s32.totalorder %s204, %s205
      %p217 = scmp.eq.s32.totalorder %s34, 1
      %p218 = por %p216, %p217
      %p220 = scmp.ne.s32.totalorder %s205, %s219
      %p221 = scmp.eq.s32.totalorder %s34, 0
      %p222 = por %p220, %p221
      %s224 = sadd.s32 %s223, 1
      %p227 = scmp.eq.s32.totalorder %s28, 1
      %p228 = scmp.ne.s32.totalorder %s223, %s225
      %p229 = scmp.eq.s32.totalorder %s28, 0
      %p230 = por %p228, %p229
      %p231 = scmp.ne.s32.totalorder %s223, %s225
      %p232 = scmp.eq.s32.totalorder %s33, 1
      %p233 = por %p231, %p232
      %p234 = scmp.ne.s32.totalorder %s225, %s226
      %p235 = scmp.eq.s32.totalorder %s33, 0
      %p236 = por %p234, %p235
      %p237 = scmp.ne.s32.totalorder %s225, %s226
      %p238 = scmp.eq.s32.totalorder %s34, 1
      %p239 = por %p237, %p238
      %p241 = scmp.ne.s32.totalorder %s226, %s240
      %p242 = scmp.eq.s32.totalorder %s34, 0
      %p243 = por %p241, %p242
      %s245 = sadd.s32 %s244, 1
      %p248 = scmp.eq.s32.totalorder %s28, 1
      %p249 = scmp.ne.s32.totalorder %s244, %s246
      %p250 = scmp.eq.s32.totalorder %s28, 0
      %p251 = por %p249, %p250
      %p252 = scmp.ne.s32.totalorder %s244, %s246
      %p253 = scmp.eq.s32.totalorder %s33, 1
      %p254 = por %p252, %p253
      %p255 = scmp.ne.s32.totalorder %s246, %s247
      %p256 = scmp.eq.s32.totalorder %s33, 0
      %p257 = por %p255, %p256
      %p258 = scmp.ne.s32.totalorder %s246, %s247
      %p259 = scmp.eq.s32.totalorder %s34, 1
      %p260 = por %p258, %p259
      %p262 = scmp.ne.s32.totalorder %s247, %s261
      %p263 = scmp.eq.s32.totalorder %s34, 0
      %p264 = por %p262, %p263
      %s266 = sadd.s32 %s265, 1
      %p269 = scmp.eq.s32.totalorder %s28, 1
      %p270 = scmp.ne.s32.totalorder %s265, %s267
      %p271 = scmp.eq.s32.totalorder %s28, 0
      %p272 = por %p270, %p271
      %p273 = scmp.ne.s32.totalorder %s265, %s267
      %p274 = scmp.eq.s32.totalorder %s33, 1
      %p275 = por %p273, %p274
      %p276 = scmp.ne.s32.totalorder %s267, %s268
      %p277 = scmp.eq.s32.totalorder %s33, 0
      %p278 = por %p276, %p277
      %p279 = scmp.ne.s32.totalorder %s267, %s268
      %p280 = scmp.eq.s32.totalorder %s34, 1
      %p281 = por %p279, %p280
      %p283 = scmp.ne.s32.totalorder %s268, %s282
      %p284 = scmp.eq.s32.totalorder %s34, 0
      %p285 = por %p283, %p284
      %s287 = sadd.s32 %s286, 1
      %p290 = scmp.eq.s32.totalorder %s28, 1
      %p291 = scmp.ne.s32.totalorder %s286, %s288
      %p292 = scmp.eq.s32.totalorder %s28, 0
      %p293 = por %p291, %p292
      %p294 = scmp.ne.s32.totalorder %s286, %s288
      %p295 = scmp.eq.s32.totalorder %s33, 1
      %p296 = por %p294, %p295
      %p297 = scmp.ne.s32.totalorder %s288, %s289
      %p298 = scmp.eq.s32.totalorder %s33, 0
      %p299 = por %p297, %p298
      %p300 = scmp.ne.s32.totalorder %s288, %s289
      %p301 = scmp.eq.s32.totalorder %s34, 1
      %p302 = por %p300, %p301
      %p304 = scmp.ne.s32.totalorder %s289, %s303
      %p305 = scmp.eq.s32.totalorder %s34, 0
      %p306 = por %p304, %p305
      %s307 = ssub.s32 %s35, %s47
      %s308 = ssub.s32 %s36, %s43
      %s309 = sor.u32 %s307, %s308
      %p310 = scmp.eq.s32.totalorder %s309, 0
      %s312 = sadd.s32 %s311, 1
      %s313 = scalar_select %p310, %s311, %s312
      %p316 = pneg %p310
      %p317 = scmp.eq.s32.totalorder %s28, 1
      %p318 = por %p316, %p317
      %p319 = scmp.ne.s32.totalorder %s311, %s314
      %p320 = scmp.eq.s32.totalorder %s28, 0
      %p321 = por %p319, %p320
      %p322 = scmp.ne.s32.totalorder %s311, %s314
      %p323 = scmp.eq.s32.totalorder %s33, 1
      %p324 = por %p322, %p323
      %p325 = scmp.ne.s32.totalorder %s314, %s315
      %p326 = scmp.eq.s32.totalorder %s33, 0
      %p327 = por %p325, %p326
      %p328 = scmp.ne.s32.totalorder %s314, %s315
      %p329 = scmp.eq.s32.totalorder %s34, 1
      %p330 = por %p328, %p329
      %p332 = scmp.ne.s32.totalorder %s315, %s331
      %p333 = scmp.eq.s32.totalorder %s34, 0
      %p334 = por %p332, %p333
      %s335 = ssub.s32 %s35, %s47
      %s336 = ssub.s32 %s36, %s43
      %s337 = sor.u32 %s335, %s336
      %p338 = scmp.eq.s32.totalorder %s337, 0
      %s340 = sadd.s32 %s339, 1
      %s341 = scalar_select %p338, %s339, %s340
      %p344 = pneg %p338
      %p345 = scmp.eq.s32.totalorder %s28, 1
      %p346 = por %p344, %p345
      %p347 = scmp.ne.s32.totalorder %s339, %s342
      %p348 = scmp.eq.s32.totalorder %s28, 0
      %p349 = por %p347, %p348
      %p350 = scmp.ne.s32.totalorder %s339, %s342
      %p351 = scmp.eq.s32.totalorder %s33, 1
      %p352 = por %p350, %p351
      %p353 = scmp.ne.s32.totalorder %s342, %s343
      %p354 = scmp.eq.s32.totalorder %s33, 0
      %p355 = por %p353, %p354
      %p356 = scmp.ne.s32.totalorder %s342, %s343
      %p357 = scmp.eq.s32.totalorder %s34, 1
      %p358 = por %p356, %p357
      %p360 = scmp.ne.s32.totalorder %s343, %s359
      %p361 = scmp.eq.s32.totalorder %s34, 0
      %p362 = por %p360, %p361
      %s363 = ssub.s32 %s35, %s47
      %s364 = ssub.s32 %s36, %s43
      %s365 = sor.u32 %s363, %s364
      %p366 = scmp.eq.s32.totalorder %s365, 0
      %s368 = sadd.s32 %s367, 1
      %s369 = scalar_select %p366, %s367, %s368
      %p372 = pneg %p366
      %p373 = scmp.eq.s32.totalorder %s28, 1
      %p374 = por %p372, %p373
      %p375 = scmp.ne.s32.totalorder %s367, %s370
      %p376 = scmp.eq.s32.totalorder %s28, 0
      %p377 = por %p375, %p376
      %p378 = scmp.ne.s32.totalorder %s367, %s370
      %p379 = scmp.eq.s32.totalorder %s33, 1
      %p380 = por %p378, %p379
      %p381 = scmp.ne.s32.totalorder %s370, %s371
      %p382 = scmp.eq.s32.totalorder %s33, 0
      %p383 = por %p381, %p382
      %p384 = scmp.ne.s32.totalorder %s370, %s371
      %p385 = scmp.eq.s32.totalorder %s34, 1
      %p386 = por %p384, %p385
      %p388 = scmp.ne.s32.totalorder %s371, %s387
      %p389 = scmp.eq.s32.totalorder %s34, 0
      %p390 = por %p388, %p389
      %s391 = ssub.s32 %s35, %s47
      %s392 = ssub.s32 %s36, %s43
      %s393 = sor.u32 %s391, %s392
      %p394 = scmp.eq.s32.totalorder %s393, 0
      %s396 = sadd.s32 %s395, 1
      %s397 = scalar_select %p394, %s395, %s396
      %p400 = pneg %p394
      %p401 = scmp.eq.s32.totalorder %s28, 1
      %p402 = por %p400, %p401
      %p403 = scmp.ne.s32.totalorder %s395, %s398
      %p404 = scmp.eq.s32.totalorder %s28, 0
      %p405 = por %p403, %p404
      %p406 = scmp.ne.s32.totalorder %s395, %s398
      %p407 = scmp.eq.s32.totalorder %s33, 1
      %p408 = por %p406, %p407
      %p409 = scmp.ne.s32.totalorder %s398, %s399
      %p410 = scmp.eq.s32.totalorder %s33, 0
      %p411 = por %p409, %p410
      %p412 = scmp.ne.s32.totalorder %s398, %s399
      %p413 = scmp.eq.s32.totalorder %s34, 1
      %p414 = por %p412, %p413
      %p416 = scmp.ne.s32.totalorder %s399, %s415
      %p417 = scmp.eq.s32.totalorder %s34, 0
      %p418 = por %p416, %p417
      %p419 = scmp.le.s32.totalorder 1, %s28
      %p420 = scmp.lt.s32.totalorder %s28, 3
      %p421 = pnand %p419, %p420
      %p422 = pneg %p421
      // Predicated region
      $region9: #{autoencoder_forward.1} parent=5 // pred_check
        _
      $region10: #{autoencoder_forward.1} parent=5 // pred_check_branch
        %424 = sbr.rel (%p421) target = $region12
      $region11: #{autoencoder_forward.1} parent=5 // pred_region
        %s425 = ssub.s32 %s28, 1
        // Predicated region
        $region13: #{autoencoder_forward.1} parent=11 // pred_check
          %p426 = pneg %p89
        $region14: #{autoencoder_forward.1} parent=11 // pred_check_branch
          %428 = sbr.rel (%p426) target = $region16
        $region15: #{autoencoder_forward.1} parent=11 // pred_region
          _
        $region16: #{autoencoder_forward.1} parent=11 // pred_fallthru
          _
        // Predicated region
        $region17: #{autoencoder_forward.1} parent=11 // pred_check
          %p429 = pneg %p110
        $region18: #{autoencoder_forward.1} parent=11 // pred_check_branch
          %431 = sbr.rel (%p429) target = $region20
        $region19: #{autoencoder_forward.1} parent=11 // pred_region
          _
        $region20: #{autoencoder_forward.1} parent=11 // pred_fallthru
          _
        // Predicated region
        $region21: #{autoencoder_forward.1} parent=11 // pred_check
          %p432 = pneg %p131
        $region22: #{autoencoder_forward.1} parent=11 // pred_check_branch
          %434 = sbr.rel (%p432) target = $region24
        $region23: #{autoencoder_forward.1} parent=11 // pred_region
          _
        $region24: #{autoencoder_forward.1} parent=11 // pred_fallthru
          _
        // Predicated region
        $region25: #{autoencoder_forward.1} parent=11 // pred_check
          %p435 = pneg %p152
        $region26: #{autoencoder_forward.1} parent=11 // pred_check_branch
          %437 = sbr.rel (%p435) target = $region28
        $region27: #{autoencoder_forward.1} parent=11 // pred_region
          _
        $region28: #{autoencoder_forward.1} parent=11 // pred_fallthru
          _
        // Predicated region
        $region29: #{autoencoder_forward.1} parent=11 // pred_check
          %p438 = pneg %p173
        $region30: #{autoencoder_forward.1} parent=11 // pred_check_branch
          %440 = sbr.rel (%p438) target = $region32
        $region31: #{autoencoder_forward.1} parent=11 // pred_region
          _
        $region32: #{autoencoder_forward.1} parent=11 // pred_fallthru
          _
        // Predicated region
        $region33: #{autoencoder_forward.1} parent=11 // pred_check
          %p441 = pneg %p194
        $region34: #{autoencoder_forward.1} parent=11 // pred_check_branch
          %443 = sbr.rel (%p441) target = $region36
        $region35: #{autoencoder_forward.1} parent=11 // pred_region
          _
        $region36: #{autoencoder_forward.1} parent=11 // pred_fallthru
          _
        // Predicated region
        $region37: #{autoencoder_forward.1} parent=11 // pred_check
          %p444 = pneg %p215
        $region38: #{autoencoder_forward.1} parent=11 // pred_check_branch
          %446 = sbr.rel (%p444) target = $region40
        $region39: #{autoencoder_forward.1} parent=11 // pred_region
          _
        $region40: #{autoencoder_forward.1} parent=11 // pred_fallthru
          _
        // Predicated region
        $region41: #{autoencoder_forward.1} parent=11 // pred_check
          %p447 = pneg %p236
        $region42: #{autoencoder_forward.1} parent=11 // pred_check_branch
          %449 = sbr.rel (%p447) target = $region44
        $region43: #{autoencoder_forward.1} parent=11 // pred_region
          _
        $region44: #{autoencoder_forward.1} parent=11 // pred_fallthru
          _
        // Predicated region
        $region45: #{autoencoder_forward.1} parent=11 // pred_check
          %p450 = pneg %p257
        $region46: #{autoencoder_forward.1} parent=11 // pred_check_branch
          %452 = sbr.rel (%p450) target = $region48
        $region47: #{autoencoder_forward.1} parent=11 // pred_region
          _
        $region48: #{autoencoder_forward.1} parent=11 // pred_fallthru
          _
        // Predicated region
        $region49: #{autoencoder_forward.1} parent=11 // pred_check
          %p453 = pneg %p278
        $region50: #{autoencoder_forward.1} parent=11 // pred_check_branch
          %455 = sbr.rel (%p453) target = $region52
        $region51: #{autoencoder_forward.1} parent=11 // pred_region
          _
        $region52: #{autoencoder_forward.1} parent=11 // pred_fallthru
          _
        // Predicated region
        $region53: #{autoencoder_forward.1} parent=11 // pred_check
          %p456 = pneg %p299
        $region54: #{autoencoder_forward.1} parent=11 // pred_check_branch
          %458 = sbr.rel (%p456) target = $region56
        $region55: #{autoencoder_forward.1} parent=11 // pred_region
          _
        $region56: #{autoencoder_forward.1} parent=11 // pred_fallthru
          _
      $region12: #{autoencoder_forward.1} parent=5 // pred_fallthru
        _
      %p459 = scmp.lt.s32.totalorder %s28, 2
      // Predicated region
      $region57: #{autoencoder_forward.1} parent=5 // pred_check
        %p460 = pneg %p459
      $region58: #{autoencoder_forward.1} parent=5 // pred_check_branch
        %462 = sbr.rel (%p460) target = $region60
      $region59: #{autoencoder_forward.1} parent=5 // pred_region
        // Predicated region
        $region61: #{autoencoder_forward.1} parent=59 // pred_check
          %p463 = pneg %p62
        $region62: #{autoencoder_forward.1} parent=59 // pred_check_branch
          %465 = sbr.rel (%p463) target = $region64
        $region63: #{autoencoder_forward.1} parent=59 // pred_region
          %s466 = smul.u32 2, %s36
          %p467 = scmp.lt.s32.totalorder %s35, 1
          %s468 = scalar_select %p467, %s35, 1
          %p469 = scmp.lt.s32.totalorder %s466, 1
          %s470 = scalar_select %p469, %s466, 1
          %s471 = smul.addr %s468, 4
          %s472 = sadd.s32 %s470, %s471
          %s473 = smul.addr %s472, 8
          %s474 = scalar_lea.vmem %s0, %s473
          %s475 = smul.u32 2, %s36
        $region64: #{autoencoder_forward.1} parent=59 // pred_fallthru
          _
      $region60: #{autoencoder_forward.1} parent=5 // pred_fallthru
        _
      %p476 = scmp.le.s32.totalorder 1, %s28
      %p477 = scmp.lt.s32.totalorder %s28, 3
      %p478 = pnand %p476, %p477
      %p479 = pneg %p478
      // Predicated region
      $region65: #{autoencoder_forward.1} parent=5 // pred_check
        _
      $region66: #{autoencoder_forward.1} parent=5 // pred_check_branch
        %481 = sbr.rel (%p478) target = $region68
      $region67: #{autoencoder_forward.1} parent=5 // pred_region
        %s482 = ssub.s32 %s28, 1
        %s483 = smul.u32 2, %s38
        %p484 = scmp.lt.s32.totalorder %s37, 1
        %s485 = scalar_select %p484, %s37, 1
        %p486 = scmp.lt.s32.totalorder %s483, 1
        %s487 = scalar_select %p486, %s483, 1
        %s488 = smul.addr %s485, 4
        %s489 = sadd.s32 %s487, %s488
        %s490 = smul.addr %s489, 8
        %s491 = scalar_lea.vmem %s0, %s490
        %p492 = pneg %p68
        %p493 = pneg %p65
        %p494 = pneg %p89
        %p495 = pneg %p86
        %p496 = pneg %p110
        %p497 = pneg %p107
        %p498 = pneg %p131
        %p499 = pneg %p128
        %p500 = pneg %p152
        %p501 = pneg %p149
        %p502 = pneg %p173
        %p503 = pneg %p170
        %p504 = pneg %p194
        %p505 = pneg %p191
        %p506 = pneg %p215
        %p507 = pneg %p212
        %p508 = pneg %p236
        %p509 = pneg %p233
        %p510 = pneg %p257
        %p511 = pneg %p254
        %p512 = pneg %p278
        %p513 = pneg %p275
        %p514 = pneg %p299
        %p515 = pneg %p296
        %p516 = pneg %p327
        %p517 = pneg %p324
        %s518 = sand.u32 %s314, 1
        %s519 = scalar_lea.sflag [#allocation3], %s518
        %s520 = sand.u32 %s314, 1
        %s521 = smul.addr %s520, 32
        %s522 = scalar_lea.vmem [#allocation2], %s521
        %p523 = pneg %p355
        %p524 = pneg %p352
        %s525 = sand.u32 %s33, 1
        %s526 = scalar_lea.sflag [#allocation5], %s525
        %s527 = sand.u32 %s342, 1
        %s528 = smul.addr %s527, 32
        %s529 = scalar_lea.vmem [#allocation4], %s528
        %p530 = pneg %p383
        %p531 = pneg %p380
        %s532 = sand.u32 %s33, 1
        %s533 = scalar_lea.sflag [#allocation5], %s532
        %s534 = sand.u32 %s370, 1
        %s535 = smul.addr %s534, 2
        %s536 = scalar_lea.vmem [#allocation6], %s535
        %p537 = pneg %p411
        %p538 = pneg %p408
        %s539 = smul.u32 2, %s38
        %p540 = scmp.lt.s32.totalorder %s37, 1
        %s541 = scalar_select %p540, %s37, 1
        %p542 = scmp.lt.s32.totalorder %s539, 1
        %s543 = scalar_select %p542, %s539, 1
        %s544 = smul.addr %s541, 2
        %s545 = sadd.s32 %s543, %s544
        %s546 = scalar_lea.vmem %s15, %s545
        %s547 = smul.u32 2, %s38
        %p548 = scmp.lt.s32.totalorder %s37, 1
        %s549 = scalar_select %p548, %s37, 1
        %p550 = scmp.lt.s32.totalorder %s547, 1
        %s551 = scalar_select %p550, %s547, 1
        %s552 = smul.addr %s549, 4
        %s553 = sadd.s32 %s551, %s552
        %s554 = smul.addr %s553, 8
        %s555 = scalar_lea.vmem %s0, %s554
        %s556 = smul.u32 2, %s38
        %s557 = smul.u32 2, %s38
        %s558 = smul.u32 2, %s38
        %s559 = smul.u32 2, %s38
        %s560 = smul.u32 2, %s38
        %p561 = scmp.lt.s32.totalorder %s37, 1
        %s562 = scalar_select %p561, %s37, 1
        %p563 = scmp.lt.s32.totalorder %s560, 1
        %s564 = scalar_select %p563, %s560, 1
        %s565 = smul.addr %s562, 2
        %s566 = sadd.s32 %s564, %s565
        %s567 = scalar_lea.vmem %s15, %s566
        %s568 = smul.u32 2, %s38
        %v569 = vld [vmem:[%s555] sm:$0xff]
        %v570 = vld [vmem:[%s555 + $0x8] sm:$0xff]
        %v571 = vld [vmem:[%s555 + $0x10] sm:$0xff]
        %v572 = vld [vmem:[%s555 + $0x18] sm:$0xff]
        %v573 = vld [vmem:[%s1] sm:$0xff]
        %v574 = vld [vmem:[%s1 + $0x8] sm:$0xff]
        %v575 = vld [vmem:[%s1 + $0x10] sm:$0xff]
        %v576 = vld [vmem:[%s1 + $0x18] sm:$0xff]
        %v577 = vld [vmem:[%s2] sm:$0xff]
        %v578 = vld [vmem:[%s2 + $0x8] sm:$0xff]
        %v579 = vld [vmem:[%s2 + $0x10] sm:$0xff]
        %v580 = vld [vmem:[%s2 + $0x18] sm:$0xff]
        %582 = vset.pattern.permute.xlu0 0
        %583 = vperm.xlu0 %582, %v577
        %v584 = vpop.permute.xlu0 %583
        %587 = vset.pattern.permute.xlu0 0
        %588 = vperm.xlu0 %587, %v578
        %v589 = vpop.permute.xlu0 %588
        %592 = vset.pattern.permute.xlu0 0
        %593 = vperm.xlu0 %592, %v579
        %v594 = vpop.permute.xlu0 %593
        %597 = vset.pattern.permute.xlu0 0
        %598 = vperm.xlu0 %597, %v580
        %v599 = vpop.permute.xlu0 %598
        %vm601 = vcmask 130048
        %v603 = vsel %vm601, %v573, 0
        %v606 = vsel %vm601, %v574, 0
        %v609 = vsel %vm601, %v575, 0
        %v612 = vsel %vm601, %v576, 0
        %614 = vmatprep.subr.mxu0 %v570
        %615 = vmatpush1.msra.mxu0 %v569
        %616 = vmatprep.subr.mxu0 %v572
        %617 = vmatpush1.msra.mxu0 %v571
        %618 = vmatprep.subr.mxu0 0.0
        %619 = vmatpush1.msra.mxu0 0.0
        %620 = vmatprep.subr.mxu0 0.0
        %621 = vmatpush1.msra.mxu0 0.0
        %622 = vmatprep.subr.mxu0 0.0
        %623 = vmatpush1.msra.mxu0 0.0
        %624 = vmatprep.subr.mxu0 0.0
        %625 = vmatpush1.msra.mxu0 0.0
        %626 = vmatprep.subr.mxu0 0.0
        %627 = vmatpush1.msra.mxu0 0.0
        %628 = vmatprep.subr.mxu0 0.0
        %629 = vmatpush1.msra.mxu0 0.0
        %630 = vmatprep.subr.mxu0 0.0
        %631 = vmatpush1.msra.mxu0 0.0
        %632 = vmatprep.subr.mxu0 0.0
        %633 = vmatpush1.msra.mxu0 0.0
        %634 = vmatprep.subr.mxu0 0.0
        %635 = vmatpush1.msra.mxu0 0.0
        %636 = vmatprep.subr.mxu0 0.0
        %637 = vmatpush1.msra.mxu0 0.0
        %638 = vmatprep.subr.mxu0 0.0
        %639 = vmatpush1.msra.mxu0 0.0
        %640 = vmatprep.subr.mxu0 0.0
        %641 = vmatpush1.msra.mxu0 0.0
        %642 = vmatprep.subr.mxu0 0.0
        %643 = vmatpush1.msra.mxu0 0.0
        %644 = vmatprep.subr.mxu0 0.0
        %645 = vmatpush1.msra.mxu0 0.0
        %646 = vmatprep.subr.mxu0 0.0
        %647 = vmatpush1.msra.mxu0 0.0
        %648 = vmatprep.subr.mxu0 0.0
        %649 = vmatpush1.msra.mxu0 0.0
        %650 = vmatprep.subr.mxu0 0.0
        %651 = vmatpush1.msra.mxu0 0.0
        %652 = vmatprep.subr.mxu0 0.0
        %653 = vmatpush1.msra.mxu0 0.0
        %654 = vmatprep.subr.mxu0 0.0
        %655 = vmatpush1.msra.mxu0 0.0
        %656 = vmatprep.subr.mxu0 0.0
        %657 = vmatpush1.msra.mxu0 0.0
        %658 = vmatprep.subr.mxu0 0.0
        %659 = vmatpush1.msra.mxu0 0.0
        %660 = vmatprep.subr.mxu0 0.0
        %661 = vmatpush1.msra.mxu0 0.0
        %662 = vmatprep.subr.mxu0 0.0
        %663 = vmatpush1.msra.mxu0 0.0
        %664 = vmatprep.subr.mxu0 0.0
        %665 = vmatpush1.msra.mxu0 0.0
        %666 = vmatprep.subr.mxu0 0.0
        %667 = vmatpush1.msra.mxu0 0.0
        %668 = vmatprep.subr.mxu0 0.0
        %669 = vmatpush1.msra.mxu0 0.0
        %670 = vmatprep.subr.mxu0 0.0
        %671 = vmatpush1.msra.mxu0 0.0
        %672 = vmatprep.subr.mxu0 0.0
        %673 = vmatpush1.msra.mxu0 0.0
        %674 = vmatprep.subr.mxu0 0.0
        %675 = vmatpush1.msra.mxu0 0.0
        %676 = vmatprep.subr.mxu0 0.0
        %677 = vmatpush1.msra.mxu0 0.0
        %678 = vmatprep.mubr.f32.mxu0 0.0
        %679 = vmatmul.mubr.f32.gmra.mrb[0].mxu0 %v603
        %v680 = vpop.f32.mrb[0].mxu0
        %v681 = vadd.f32 %v584, %v680
        %v682 = vpop.f32.mrb[0].mxu0
        %v683 = vadd.f32 %v584, %v682
        %684 = vmatprep.mubr.f32.mxu0 0.0
        %685 = vmatmul.mubr.f32.gmra.mrb[0].mxu0 %v606
        %v686 = vpop.f32.mrb[0].mxu0
        %v687 = vadd.f32 %v589, %v686
        %v688 = vpop.f32.mrb[0].mxu0
        %v689 = vadd.f32 %v589, %v688
        %690 = vmatprep.mubr.f32.mxu0 0.0
        %691 = vmatmul.mubr.f32.gmra.mrb[0].mxu0 %v609
        %v692 = vpop.f32.mrb[0].mxu0
        %v693 = vadd.f32 %v594, %v692
        %v694 = vpop.f32.mrb[0].mxu0
        %v695 = vadd.f32 %v594, %v694
        %696 = vmatprep.mubr.f32.mxu0 0.0
        %697 = vmatmul.mubr.f32.gmra.mrb[0].mxu0 %v612
        %v698 = vpop.f32.mrb[0].mxu0
        %v699 = vadd.f32 %v599, %v698
        %v700 = vpop.f32.mrb[0].mxu0
        %v701 = vadd.f32 %v599, %v700
        %702 = vdwg.mxu0
        %v703 = vmax.f32 %v681, 0.0
        %v704 = vmax.f32 %v683, 0.0
        %v705 = vmax.f32 %v687, 0.0
        %v706 = vmax.f32 %v689, 0.0
        %v707 = vmax.f32 %v693, 0.0
        %v708 = vmax.f32 %v695, 0.0
        %v709 = vmax.f32 %v699, 0.0
        %v710 = vmax.f32 %v701, 0.0
        %v711 = vld [vmem:[%s3] sm:$0xff]
        %v712 = vld [vmem:[%s4] sm:$0xff]
        %714 = vset.pattern.permute.xlu0 0
        %715 = vperm.xlu0 %714, %v712
        %v716 = vpop.permute.xlu0 %715
        %vm718 = vcmask 261120
        %v720 = vsel %vm718, %v711, 0
        %722 = vmatprep.subr.mxu0 %v704
        %723 = vmatpush1.msra.mxu0 %v703
        %724 = vmatprep.subr.mxu0 %v706
        %725 = vmatpush1.msra.mxu0 %v705
        %726 = vmatprep.subr.mxu0 %v708
        %727 = vmatpush1.msra.mxu0 %v707
        %728 = vmatprep.subr.mxu0 %v710
        %729 = vmatpush1.msra.mxu0 %v709
        %730 = vmatprep.subr.mxu0 0.0
        %731 = vmatpush1.msra.mxu0 0.0
        %732 = vmatprep.subr.mxu0 0.0
        %733 = vmatpush1.msra.mxu0 0.0
        %734 = vmatprep.subr.mxu0 0.0
        %735 = vmatpush1.msra.mxu0 0.0
        %736 = vmatprep.subr.mxu0 0.0
        %737 = vmatpush1.msra.mxu0 0.0
        %738 = vmatprep.subr.mxu0 0.0
        %739 = vmatpush1.msra.mxu0 0.0
        %740 = vmatprep.subr.mxu0 0.0
        %741 = vmatpush1.msra.mxu0 0.0
        %742 = vmatprep.subr.mxu0 0.0
        %743 = vmatpush1.msra.mxu0 0.0
        %744 = vmatprep.subr.mxu0 0.0
        %745 = vmatpush1.msra.mxu0 0.0
        %746 = vmatprep.subr.mxu0 0.0
        %747 = vmatpush1.msra.mxu0 0.0
        %748 = vmatprep.subr.mxu0 0.0
        %749 = vmatpush1.msra.mxu0 0.0
        %750 = vmatprep.subr.mxu0 0.0
        %751 = vmatpush1.msra.mxu0 0.0
        %752 = vmatprep.subr.mxu0 0.0
        %753 = vmatpush1.msra.mxu0 0.0
        %754 = vmatprep.subr.mxu0 0.0
        %755 = vmatpush1.msra.mxu0 0.0
        %756 = vmatprep.subr.mxu0 0.0
        %757 = vmatpush1.msra.mxu0 0.0
        %758 = vmatprep.subr.mxu0 0.0
        %759 = vmatpush1.msra.mxu0 0.0
        %760 = vmatprep.subr.mxu0 0.0
        %761 = vmatpush1.msra.mxu0 0.0
        %762 = vmatprep.subr.mxu0 0.0
        %763 = vmatpush1.msra.mxu0 0.0
        %764 = vmatprep.subr.mxu0 0.0
        %765 = vmatpush1.msra.mxu0 0.0
        %766 = vmatprep.subr.mxu0 0.0
        %767 = vmatpush1.msra.mxu0 0.0
        %768 = vmatprep.subr.mxu0 0.0
        %769 = vmatpush1.msra.mxu0 0.0
        %770 = vmatprep.subr.mxu0 0.0
        %771 = vmatpush1.msra.mxu0 0.0
        %772 = vmatprep.subr.mxu0 0.0
        %773 = vmatpush1.msra.mxu0 0.0
        %774 = vmatprep.subr.mxu0 0.0
        %775 = vmatpush1.msra.mxu0 0.0
        %776 = vmatprep.subr.mxu0 0.0
        %777 = vmatpush1.msra.mxu0 0.0
        %778 = vmatprep.subr.mxu0 0.0
        %779 = vmatpush1.msra.mxu0 0.0
        %780 = vmatprep.subr.mxu0 0.0
        %781 = vmatpush1.msra.mxu0 0.0
        %782 = vmatprep.subr.mxu0 0.0
        %783 = vmatpush1.msra.mxu0 0.0
        %784 = vmatprep.subr.mxu0 0.0
        %785 = vmatpush1.msra.mxu0 0.0
        %786 = vmatprep.mubr.f32.mxu0 0.0
        %787 = vmatmul.mubr.f32.gmra.mrb[0].mxu0 %v720
        %v788 = vpop.f32.mrb[0].mxu0
        %v789 = vadd.f32 %v716, %v788
        %v790 = vpop.f32.mrb[0].mxu0
        %v791 = vadd.f32 %v716, %v790
        %792 = vdwg.mxu0
        %v793 = vld [vmem:[%s5] sm:$0xff]
        %v794 = vld [vmem:[%s5 + $0x8] sm:$0xff]
        %v795 = vmul.f32 %v789, %v789
        %v796 = vmul.f32 %v791, %v791
        %v797 = vrot.slane %v795, 4
        %v798 = vadd.f32 %v795, %v797
        %v799 = vrot.slane %v798, 2
        %v800 = vadd.f32 %v798, %v799
        %v801 = vrot.slane %v800, 1
        %v802 = vadd.f32 %v800, %v801
        %v803 = vrot.slane %v796, 4
        %v804 = vadd.f32 %v796, %v803
        %v805 = vrot.slane %v804, 2
        %v806 = vadd.f32 %v804, %v805
        %v807 = vrot.slane %v806, 1
        %v808 = vadd.f32 %v806, %v807
        %v809 = vld [vmem:[%s7] sm:$0xff]
        %v810 = vld [vmem:[%s7 + $0x8] sm:$0xff]
        %vm811 = vcmask 64512
        %v813 = vsel %vm811, %v793, 0
        %v816 = vsel %vm811, %v794, 0
        %818 = vmatprep.subr.mxu0 %v791
        %819 = vmatpush1.msra.mxu0 %v789
        %820 = vmatprep.subr.mxu0 0.0
        %821 = vmatpush1.msra.mxu0 0.0
        %822 = vmatprep.subr.mxu0 0.0
        %823 = vmatpush1.msra.mxu0 0.0
        %824 = vmatprep.subr.mxu0 0.0
        %825 = vmatpush1.msra.mxu0 0.0
        %826 = vmatprep.subr.mxu0 0.0
        %827 = vmatpush1.msra.mxu0 0.0
        %828 = vmatprep.subr.mxu0 0.0
        %829 = vmatpush1.msra.mxu0 0.0
        %830 = vmatprep.subr.mxu0 0.0
        %831 = vmatpush1.msra.mxu0 0.0
        %832 = vmatprep.subr.mxu0 0.0
        %833 = vmatpush1.msra.mxu0 0.0
        %834 = vmatprep.subr.mxu0 0.0
        %835 = vmatpush1.msra.mxu0 0.0
        %836 = vmatprep.subr.mxu0 0.0
        %837 = vmatpush1.msra.mxu0 0.0
        %838 = vmatprep.subr.mxu0 0.0
        %839 = vmatpush1.msra.mxu0 0.0
        %840 = vmatprep.subr.mxu0 0.0
        %841 = vmatpush1.msra.mxu0 0.0
        %842 = vmatprep.subr.mxu0 0.0
        %843 = vmatpush1.msra.mxu0 0.0
        %844 = vmatprep.subr.mxu0 0.0
        %845 = vmatpush1.msra.mxu0 0.0
        %846 = vmatprep.subr.mxu0 0.0
        %847 = vmatpush1.msra.mxu0 0.0
        %848 = vmatprep.subr.mxu0 0.0
        %849 = vmatpush1.msra.mxu0 0.0
        %850 = vmatprep.subr.mxu0 0.0
        %851 = vmatpush1.msra.mxu0 0.0
        %852 = vmatprep.subr.mxu0 0.0
        %853 = vmatpush1.msra.mxu0 0.0
        %854 = vmatprep.subr.mxu0 0.0
        %855 = vmatpush1.msra.mxu0 0.0
        %856 = vmatprep.subr.mxu0 0.0
        %857 = vmatpush1.msra.mxu0 0.0
        %858 = vmatprep.subr.mxu0 0.0
        %859 = vmatpush1.msra.mxu0 0.0
        %860 = vmatprep.subr.mxu0 0.0
        %861 = vmatpush1.msra.mxu0 0.0
        %862 = vmatprep.subr.mxu0 0.0
        %863 = vmatpush1.msra.mxu0 0.0
        %864 = vmatprep.subr.mxu0 0.0
        %865 = vmatpush1.msra.mxu0 0.0
        %866 = vmatprep.subr.mxu0 0.0
        %867 = vmatpush1.msra.mxu0 0.0
        %868 = vmatprep.subr.mxu0 0.0
        %869 = vmatpush1.msra.mxu0 0.0
        %870 = vmatprep.subr.mxu0 0.0
        %871 = vmatpush1.msra.mxu0 0.0
        %872 = vmatprep.subr.mxu0 0.0
        %873 = vmatpush1.msra.mxu0 0.0
        %874 = vmatprep.subr.mxu0 0.0
        %875 = vmatpush1.msra.mxu0 0.0
        %876 = vmatprep.subr.mxu0 0.0
        %877 = vmatpush1.msra.mxu0 0.0
        %878 = vmatprep.subr.mxu0 0.0
        %879 = vmatpush1.msra.mxu0 0.0
        %880 = vmatprep.subr.mxu0 0.0
        %881 = vmatpush1.msra.mxu0 0.0
        %882 = vmatprep.mubr.f32.mxu0 0.0
        %883 = vmatmul.mubr.f32.gmra.mrb[0].mxu0 %v813
        %v884 = vpop.f32.mrb[0].mxu0
        %v885 = vadd.f32 0.0, %v884
        %v886 = vpop.f32.mrb[0].mxu0
        %v887 = vadd.f32 0.0, %v886
        %888 = vmatprep.mubr.f32.mxu0 0.0
        %889 = vmatmul.mubr.f32.gmra.mrb[0].mxu0 %v816
        %v890 = vpop.f32.mrb[0].mxu0
        %v891 = vadd.f32 0.0, %v890
        %v892 = vpop.f32.mrb[0].mxu0
        %v893 = vadd.f32 0.0, %v892
        %894 = vdwg.mxu0
        %v895 = vmul.f32 %v885, 2.0
        %v896 = vmul.f32 %v887, 2.0
        %v897 = vmul.f32 %v891, 2.0
        %v898 = vmul.f32 %v893, 2.0
        %900 = vset.pattern.permute.xlu0 0
        %901 = vperm.xlu0 %900, %v809
        %v902 = vpop.permute.xlu0 %901
        %905 = vset.pattern.permute.xlu0 0
        %906 = vperm.xlu0 %905, %v810
        %v907 = vpop.permute.xlu0 %906
        %v909 = vsub.f32 %v902, %v895
        %v910 = vsub.f32 %v902, %v896
        %v911 = vsub.f32 %v907, %v897
        %v912 = vsub.f32 %v907, %v898
        %v913 = vadd.f32 %v909, %v802
        %v914 = vadd.f32 %v910, %v808
        %v915 = vadd.f32 %v911, %v802
        %v916 = vadd.f32 %v912, %v808
        %v917 = vmin.f32 %v913, %v915
        %v918 = vrot.slane %v917, 4
        %v919 = vmin.f32 %v917, %v918
        %v920 = vrot.slane %v919, 2
        %v921 = vmin.f32 %v919, %v920
        %v922 = vrot.slane %v921, 1
        %v923 = vmin.f32 %v921, %v922
        %v924 = vmin.f32 %v914, %v916
        %v925 = vrot.slane %v924, 4
        %v926 = vmin.f32 %v924, %v925
        %v927 = vrot.slane %v926, 2
        %v928 = vmin.f32 %v926, %v927
        %v929 = vrot.slane %v928, 1
        %v930 = vmin.f32 %v928, %v929
        %v931 = vlaneseq
        %v932 = vshrl.u32 %v931, 7
        %v933 = vadd.s32 %v932, 8
        %vm934 = vcmp.le.f32.partialorder %v913, %v923
        %vm935 = vcmp.le.f32.partialorder %v914, %v930
        %vm936 = vcmp.le.f32.partialorder %v915, %v923
        %vm937 = vcmp.le.f32.partialorder %v916, %v930
        %v938 = vsel %vm934, %v932, 16
        %v939 = vsel %vm935, %v932, 16
        %v940 = vsel %vm936, %v933, 16
        %v941 = vsel %vm937, %v933, 16
        %vm942 = vcmp.lt.s32.totalorder %v938, %v940
        %v943 = vsel %vm942, %v938, %v940
        %v944 = vrot.slane %v943, 4
        %vm945 = vcmp.lt.s32.totalorder %v943, %v944
        %v946 = vsel %vm945, %v943, %v944
        %v947 = vrot.slane %v946, 2
        %vm948 = vcmp.lt.s32.totalorder %v946, %v947
        %v949 = vsel %vm948, %v946, %v947
        %v950 = vrot.slane %v949, 1
        %vm951 = vcmp.lt.s32.totalorder %v949, %v950
        %v952 = vsel %vm951, %v949, %v950
        %vm953 = vcmp.lt.s32.totalorder %v939, %v941
        %v954 = vsel %vm953, %v939, %v941
        %v955 = vrot.slane %v954, 4
        %vm956 = vcmp.lt.s32.totalorder %v954, %v955
        %v957 = vsel %vm956, %v954, %v955
        %v958 = vrot.slane %v957, 2
        %vm959 = vcmp.lt.s32.totalorder %v957, %v958
        %v960 = vsel %vm959, %v957, %v958
        %v961 = vrot.slane %v960, 1
        %vm962 = vcmp.lt.s32.totalorder %v960, %v961
        %v963 = vsel %vm962, %v960, %v961
        %vm964 = vcmp.eq.s32.totalorder %v932, %v952
        %vm965 = vcmp.eq.s32.totalorder %v932, %v963
        %vm966 = vcmp.eq.s32.totalorder %v933, %v952
        %vm967 = vcmp.eq.s32.totalorder %v933, %v963
        %v968 = vsel %vm964, 1, 0
        %v969 = vsel %vm965, 1, 0
        %v970 = vsel %vm966, 1, 0
        %v971 = vsel %vm967, 1, 0
        %v972 = vcvt.s32.f32 %v968
        %v973 = vcvt.s32.f32 %v969
        %v974 = vcvt.s32.f32 %v970
        %v975 = vcvt.s32.f32 %v971
        %v976 = vld [vmem:[%s6] sm:$0xff]
        %v978 = vsel %vm601, %v976, 0
        %980 = vmatprep.subr.mxu0 %v973
        %981 = vmatpush1.msra.mxu0 %v972
        %982 = vmatprep.subr.mxu0 %v975
        %983 = vmatpush1.msra.mxu0 %v974
        %984 = vmatprep.subr.mxu0 0.0
        %985 = vmatpush1.msra.mxu0 0.0
        %986 = vmatprep.subr.mxu0 0.0
        %987 = vmatpush1.msra.mxu0 0.0
        %988 = vmatprep.subr.mxu0 0.0
        %989 = vmatpush1.msra.mxu0 0.0
        %990 = vmatprep.subr.mxu0 0.0
        %991 = vmatpush1.msra.mxu0 0.0
        %992 = vmatprep.subr.mxu0 0.0
        %993 = vmatpush1.msra.mxu0 0.0
        %994 = vmatprep.subr.mxu0 0.0
        %995 = vmatpush1.msra.mxu0 0.0
        %996 = vmatprep.subr.mxu0 0.0
        %997 = vmatpush1.msra.mxu0 0.0
        %998 = vmatprep.subr.mxu0 0.0
        %999 = vmatpush1.msra.mxu0 0.0
        %1000 = vmatprep.subr.mxu0 0.0
        %1001 = vmatpush1.msra.mxu0 0.0
        %1002 = vmatprep.subr.mxu0 0.0
        %1003 = vmatpush1.msra.mxu0 0.0
        %1004 = vmatprep.subr.mxu0 0.0
        %1005 = vmatpush1.msra.mxu0 0.0
        %1006 = vmatprep.subr.mxu0 0.0
        %1007 = vmatpush1.msra.mxu0 0.0
        %1008 = vmatprep.subr.mxu0 0.0
        %1009 = vmatpush1.msra.mxu0 0.0
        %1010 = vmatprep.subr.mxu0 0.0
        %1011 = vmatpush1.msra.mxu0 0.0
        %1012 = vmatprep.subr.mxu0 0.0
        %1013 = vmatpush1.msra.mxu0 0.0
        %1014 = vmatprep.subr.mxu0 0.0
        %1015 = vmatpush1.msra.mxu0 0.0
        %1016 = vmatprep.subr.mxu0 0.0
        %1017 = vmatpush1.msra.mxu0 0.0
        %1018 = vmatprep.subr.mxu0 0.0
        %1019 = vmatpush1.msra.mxu0 0.0
        %1020 = vmatprep.subr.mxu0 0.0
        %1021 = vmatpush1.msra.mxu0 0.0
        %1022 = vmatprep.subr.mxu0 0.0
        %1023 = vmatpush1.msra.mxu0 0.0
        %1024 = vmatprep.subr.mxu0 0.0
        %1025 = vmatpush1.msra.mxu0 0.0
        %1026 = vmatprep.subr.mxu0 0.0
        %1027 = vmatpush1.msra.mxu0 0.0
        %1028 = vmatprep.subr.mxu0 0.0
        %1029 = vmatpush1.msra.mxu0 0.0
        %1030 = vmatprep.subr.mxu0 0.0
        %1031 = vmatpush1.msra.mxu0 0.0
        %1032 = vmatprep.subr.mxu0 0.0
        %1033 = vmatpush1.msra.mxu0 0.0
        %1034 = vmatprep.subr.mxu0 0.0
        %1035 = vmatpush1.msra.mxu0 0.0
        %1036 = vmatprep.subr.mxu0 0.0
        %1037 = vmatpush1.msra.mxu0 0.0
        %1038 = vmatprep.subr.mxu0 0.0
        %1039 = vmatpush1.msra.mxu0 0.0
        %1040 = vmatprep.subr.mxu0 0.0
        %1041 = vmatpush1.msra.mxu0 0.0
        %1042 = vmatprep.subr.mxu0 0.0
        %1043 = vmatpush1.msra.mxu0 0.0
        %1044 = vmatprep.mubr.f32.mxu0 0.0
        %1045 = vmatmul.mubr.f32.gmra.mrb[0].mxu0 %v978
        %v1046 = vpop.f32.mrb[0].mxu0
        %v1047 = vadd.f32 0.0, %v1046
        %v1048 = vpop.f32.mrb[0].mxu0
        %v1049 = vadd.f32 0.0, %v1048
        %1050 = vdwg.mxu0
        %v1051 = vld [vmem:[%s8] sm:$0xff]
        %v1052 = vld [vmem:[%s8 + $0x8] sm:$0xff]
        %v1053 = vld [vmem:[%s8 + $0x10] sm:$0xff]
        %v1054 = vld [vmem:[%s8 + $0x18] sm:$0xff]
        %v1055 = vld [vmem:[%s9] sm:$0xff]
        %v1056 = vld [vmem:[%s9 + $0x8] sm:$0xff]
        %v1057 = vld [vmem:[%s9 + $0x10] sm:$0xff]
        %v1058 = vld [vmem:[%s9 + $0x18] sm:$0xff]
        %1060 = vset.pattern.permute.xlu0 0
        %1061 = vperm.xlu0 %1060, %v1055
        %v1062 = vpop.permute.xlu0 %1061
        %1065 = vset.pattern.permute.xlu0 0
        %1066 = vperm.xlu0 %1065, %v1056
        %v1067 = vpop.permute.xlu0 %1066
        %1070 = vset.pattern.permute.xlu0 0
        %1071 = vperm.xlu0 %1070, %v1057
        %v1072 = vpop.permute.xlu0 %1071
        %1075 = vset.pattern.permute.xlu0 0
        %1076 = vperm.xlu0 %1075, %v1058
        %v1077 = vpop.permute.xlu0 %1076
        %v1080 = vsel %vm811, %v1051, 0
        %v1083 = vsel %vm811, %v1052, 0
        %v1086 = vsel %vm811, %v1053, 0
        %v1089 = vsel %vm811, %v1054, 0
        %1091 = vmatprep.subr.mxu0 %v1049
        %1092 = vmatpush1.msra.mxu0 %v1047
        %1093 = vmatprep.subr.mxu0 0.0
        %1094 = vmatpush1.msra.mxu0 0.0
        %1095 = vmatprep.subr.mxu0 0.0
        %1096 = vmatpush1.msra.mxu0 0.0
        %1097 = vmatprep.subr.mxu0 0.0
        %1098 = vmatpush1.msra.mxu0 0.0
        %1099 = vmatprep.subr.mxu0 0.0
        %1100 = vmatpush1.msra.mxu0 0.0
        %1101 = vmatprep.subr.mxu0 0.0
        %1102 = vmatpush1.msra.mxu0 0.0
        %1103 = vmatprep.subr.mxu0 0.0
        %1104 = vmatpush1.msra.mxu0 0.0
        %1105 = vmatprep.subr.mxu0 0.0
        %1106 = vmatpush1.msra.mxu0 0.0
        %1107 = vmatprep.subr.mxu0 0.0
        %1108 = vmatpush1.msra.mxu0 0.0
        %1109 = vmatprep.subr.mxu0 0.0
        %1110 = vmatpush1.msra.mxu0 0.0
        %1111 = vmatprep.subr.mxu0 0.0
        %1112 = vmatpush1.msra.mxu0 0.0
        %1113 = vmatprep.subr.mxu0 0.0
        %1114 = vmatpush1.msra.mxu0 0.0
        %1115 = vmatprep.subr.mxu0 0.0
        %1116 = vmatpush1.msra.mxu0 0.0
        %1117 = vmatprep.subr.mxu0 0.0
        %1118 = vmatpush1.msra.mxu0 0.0
        %1119 = vmatprep.subr.mxu0 0.0
        %1120 = vmatpush1.msra.mxu0 0.0
        %1121 = vmatprep.subr.mxu0 0.0
        %1122 = vmatpush1.msra.mxu0 0.0
        %1123 = vmatprep.subr.mxu0 0.0
        %1124 = vmatpush1.msra.mxu0 0.0
        %1125 = vmatprep.subr.mxu0 0.0
        %1126 = vmatpush1.msra.mxu0 0.0
        %1127 = vmatprep.subr.mxu0 0.0
        %1128 = vmatpush1.msra.mxu0 0.0
        %1129 = vmatprep.subr.mxu0 0.0
        %1130 = vmatpush1.msra.mxu0 0.0
        %1131 = vmatprep.subr.mxu0 0.0
        %1132 = vmatpush1.msra.mxu0 0.0
        %1133 = vmatprep.subr.mxu0 0.0
        %1134 = vmatpush1.msra.mxu0 0.0
        %1135 = vmatprep.subr.mxu0 0.0
        %1136 = vmatpush1.msra.mxu0 0.0
        %1137 = vmatprep.subr.mxu0 0.0
        %1138 = vmatpush1.msra.mxu0 0.0
        %1139 = vmatprep.subr.mxu0 0.0
        %1140 = vmatpush1.msra.mxu0 0.0
        %1141 = vmatprep.subr.mxu0 0.0
        %1142 = vmatpush1.msra.mxu0 0.0
        %1143 = vmatprep.subr.mxu0 0.0
        %1144 = vmatpush1.msra.mxu0 0.0
        %1145 = vmatprep.subr.mxu0 0.0
        %1146 = vmatpush1.msra.mxu0 0.0
        %1147 = vmatprep.subr.mxu0 0.0
        %1148 = vmatpush1.msra.mxu0 0.0
        %1149 = vmatprep.subr.mxu0 0.0
        %1150 = vmatpush1.msra.mxu0 0.0
        %1151 = vmatprep.subr.mxu0 0.0
        %1152 = vmatpush1.msra.mxu0 0.0
        %1153 = vmatprep.subr.mxu0 0.0
        %1154 = vmatpush1.msra.mxu0 0.0
        %1155 = vmatprep.mubr.f32.mxu0 0.0
        %1156 = vmatmul.mubr.f32.gmra.mrb[0].mxu0 %v1080
        %v1157 = vpop.f32.mrb[0].mxu0
        %v1158 = vadd.f32 %v1062, %v1157
        %v1159 = vpop.f32.mrb[0].mxu0
        %v1160 = vadd.f32 %v1062, %v1159
        %1161 = vmatprep.mubr.f32.mxu0 0.0
        %1162 = vmatmul.mubr.f32.gmra.mrb[0].mxu0 %v1083
        %v1163 = vpop.f32.mrb[0].mxu0
        %v1164 = vadd.f32 %v1067, %v1163
        %v1165 = vpop.f32.mrb[0].mxu0
        %v1166 = vadd.f32 %v1067, %v1165
        %1167 = vmatprep.mubr.f32.mxu0 0.0
        %1168 = vmatmul.mubr.f32.gmra.mrb[0].mxu0 %v1086
        %v1169 = vpop.f32.mrb[0].mxu0
        %v1170 = vadd.f32 %v1072, %v1169
        %v1171 = vpop.f32.mrb[0].mxu0
        %v1172 = vadd.f32 %v1072, %v1171
        %1173 = vmatprep.mubr.f32.mxu0 0.0
        %1174 = vmatmul.mubr.f32.gmra.mrb[0].mxu0 %v1089
        %v1175 = vpop.f32.mrb[0].mxu0
        %v1176 = vadd.f32 %v1077, %v1175
        %v1177 = vpop.f32.mrb[0].mxu0
        %v1178 = vadd.f32 %v1077, %v1177
        %1179 = vdwg.mxu0
        %v1180 = vmax.f32 %v1158, 0.0
        %v1181 = vmax.f32 %v1160, 0.0
        %v1182 = vmax.f32 %v1164, 0.0
        %v1183 = vmax.f32 %v1166, 0.0
        %v1184 = vmax.f32 %v1170, 0.0
        %v1185 = vmax.f32 %v1172, 0.0
        %v1186 = vmax.f32 %v1176, 0.0
        %v1187 = vmax.f32 %v1178, 0.0
        %v1188 = vld [vmem:[%s10] sm:$0xff]
        %v1189 = vld [vmem:[%s10 + $0x8] sm:$0xff]
        %v1190 = vld [vmem:[%s10 + $0x10] sm:$0xff]
        %v1191 = vld [vmem:[%s10 + $0x18] sm:$0xff]
        %v1192 = vld [vmem:[%s11] sm:$0xff]
        %v1193 = vld [vmem:[%s11 + $0x8] sm:$0xff]
        %v1194 = vld [vmem:[%s11 + $0x10] sm:$0xff]
        %v1195 = vld [vmem:[%s11 + $0x18] sm:$0xff]
        %1197 = vset.pattern.permute.xlu0 0
        %1198 = vperm.xlu0 %1197, %v1192
        %v1199 = vpop.permute.xlu0 %1198
        %1202 = vset.pattern.permute.xlu0 0
        %1203 = vperm.xlu0 %1202, %v1193
        %v1204 = vpop.permute.xlu0 %1203
        %1207 = vset.pattern.permute.xlu0 0
        %1208 = vperm.xlu0 %1207, %v1194
        %v1209 = vpop.permute.xlu0 %1208
        %1212 = vset.pattern.permute.xlu0 0
        %1213 = vperm.xlu0 %1212, %v1195
        %v1214 = vpop.permute.xlu0 %1213
        %v1217 = vsel %vm718, %v1188, 0
        %v1220 = vsel %vm718, %v1189, 0
        %v1223 = vsel %vm718, %v1190, 0
        %v1226 = vsel %vm718, %v1191, 0
        %1228 = vmatprep.subr.mxu0 %v1181
        %1229 = vmatpush1.msra.mxu0 %v1180
        %1230 = vmatprep.subr.mxu0 %v1183
        %1231 = vmatpush1.msra.mxu0 %v1182
        %1232 = vmatprep.subr.mxu0 %v1185
        %1233 = vmatpush1.msra.mxu0 %v1184
        %1234 = vmatprep.subr.mxu0 %v1187
        %1235 = vmatpush1.msra.mxu0 %v1186
        %1236 = vmatprep.subr.mxu0 0.0
        %1237 = vmatpush1.msra.mxu0 0.0
        %1238 = vmatprep.subr.mxu0 0.0
        %1239 = vmatpush1.msra.mxu0 0.0
        %1240 = vmatprep.subr.mxu0 0.0
        %1241 = vmatpush1.msra.mxu0 0.0
        %1242 = vmatprep.subr.mxu0 0.0
        %1243 = vmatpush1.msra.mxu0 0.0
        %1244 = vmatprep.subr.mxu0 0.0
        %1245 = vmatpush1.msra.mxu0 0.0
        %1246 = vmatprep.subr.mxu0 0.0
        %1247 = vmatpush1.msra.mxu0 0.0
        %1248 = vmatprep.subr.mxu0 0.0
        %1249 = vmatpush1.msra.mxu0 0.0
        %1250 = vmatprep.subr.mxu0 0.0
        %1251 = vmatpush1.msra.mxu0 0.0
        %1252 = vmatprep.subr.mxu0 0.0
        %1253 = vmatpush1.msra.mxu0 0.0
        %1254 = vmatprep.subr.mxu0 0.0
        %1255 = vmatpush1.msra.mxu0 0.0
        %1256 = vmatprep.subr.mxu0 0.0
        %1257 = vmatpush1.msra.mxu0 0.0
        %1258 = vmatprep.subr.mxu0 0.0
        %1259 = vmatpush1.msra.mxu0 0.0
        %1260 = vmatprep.subr.mxu0 0.0
        %1261 = vmatpush1.msra.mxu0 0.0
        %1262 = vmatprep.subr.mxu0 0.0
        %1263 = vmatpush1.msra.mxu0 0.0
        %1264 = vmatprep.subr.mxu0 0.0
        %1265 = vmatpush1.msra.mxu0 0.0
        %1266 = vmatprep.subr.mxu0 0.0
        %1267 = vmatpush1.msra.mxu0 0.0
        %1268 = vmatprep.subr.mxu0 0.0
        %1269 = vmatpush1.msra.mxu0 0.0
        %1270 = vmatprep.subr.mxu0 0.0
        %1271 = vmatpush1.msra.mxu0 0.0
        %1272 = vmatprep.subr.mxu0 0.0
        %1273 = vmatpush1.msra.mxu0 0.0
        %1274 = vmatprep.subr.mxu0 0.0
        %1275 = vmatpush1.msra.mxu0 0.0
        %1276 = vmatprep.subr.mxu0 0.0
        %1277 = vmatpush1.msra.mxu0 0.0
        %1278 = vmatprep.subr.mxu0 0.0
        %1279 = vmatpush1.msra.mxu0 0.0
        %1280 = vmatprep.subr.mxu0 0.0
        %1281 = vmatpush1.msra.mxu0 0.0
        %1282 = vmatprep.subr.mxu0 0.0
        %1283 = vmatpush1.msra.mxu0 0.0
        %1284 = vmatprep.subr.mxu0 0.0
        %1285 = vmatpush1.msra.mxu0 0.0
        %1286 = vmatprep.subr.mxu0 0.0
        %1287 = vmatpush1.msra.mxu0 0.0
        %1288 = vmatprep.subr.mxu0 0.0
        %1289 = vmatpush1.msra.mxu0 0.0
        %1290 = vmatprep.subr.mxu0 0.0
        %1291 = vmatpush1.msra.mxu0 0.0
        %1292 = vmatprep.mubr.f32.mxu0 0.0
        %1293 = vmatmul.mubr.f32.gmra.mrb[0].mxu0 %v1217
        %v1294 = vpop.f32.mrb[0].mxu0
        %v1295 = vadd.f32 %v1199, %v1294
        %v1296 = vpop.f32.mrb[0].mxu0
        %v1297 = vadd.f32 %v1199, %v1296
        %1298 = vmatprep.mubr.f32.mxu0 0.0
        %1299 = vmatmul.mubr.f32.gmra.mrb[0].mxu0 %v1220
        %v1300 = vpop.f32.mrb[0].mxu0
        %v1301 = vadd.f32 %v1204, %v1300
        %v1302 = vpop.f32.mrb[0].mxu0
        %v1303 = vadd.f32 %v1204, %v1302
        %1304 = vmatprep.mubr.f32.mxu0 0.0
        %1305 = vmatmul.mubr.f32.gmra.mrb[0].mxu0 %v1223
        %v1306 = vpop.f32.mrb[0].mxu0
        %v1307 = vadd.f32 %v1209, %v1306
        %v1308 = vpop.f32.mrb[0].mxu0
        %v1309 = vadd.f32 %v1209, %v1308
        %1310 = vmatprep.mubr.f32.mxu0 0.0
        %1311 = vmatmul.mubr.f32.gmra.mrb[0].mxu0 %v1226
        %v1312 = vpop.f32.mrb[0].mxu0
        %v1313 = vadd.f32 %v1214, %v1312
        %v1314 = vpop.f32.mrb[0].mxu0
        %v1315 = vadd.f32 %v1214, %v1314
        %1316 = vdwg.mxu0
        %1317 = vst [vmem:[%s522] sm:$0xff] %v1295
        %1318 = vst [vmem:[%s522 + $0x8] sm:$0xff] %v1297
        %1319 = vst [vmem:[%s522 + $0x10] sm:$0xff] %v1301
        %1320 = vst [vmem:[%s522 + $0x18] sm:$0xff] %v1303
        %1321 = vst [vmem:[%s529] sm:$0xff] %v1307
        %1322 = vst [vmem:[%s529 + $0x8] sm:$0xff] %v1309
        %1323 = vst [vmem:[%s529 + $0x10] sm:$0xff] %v1313
        %1324 = vst [vmem:[%s529 + $0x18] sm:$0xff] %v1315
        %v1325 = vcombine.low %v952, %v963
        %v1327 = vunpack.c.l.s4 1966171168
        %v1328 = vunpack.c.0.s8 %v1327
        %v1329 = vlaneseq
        %v1330 = vshrl.u32 %v1329, 7
        %v1331 = vsub.s32 %v1328, %v1330
        %v1332 = vrot.slane %v1325, %v1331
        %v1334 = vunpack.c.l.s4 1966171168
        %v1335 = vunpack.c.0.s8 %v1334
        %v1336 = vlaneseq
        %v1337 = vshrl.u32 %v1336, 7
        %v1338 = vsub.s32 %v1335, %v1337
        %v1339 = vrot.slane %v1332, %v1338
        %v1340 = vlaneseq
        %vm1341 = vcmp.ge.s32.totalorder %v1340, 0
        %vm1342 = vcmp.lt.s32.totalorder %v1340, 256
        %vm1343 = vmand %vm1341, %vm1342
        %1344 = vst.msk [vmem:[%s536] sm:$0x3] %vm1343, %v1339
        %v1347 = vcombine.low %v923, %v930
        %v1349 = vunpack.c.l.s4 1966171168
        %v1350 = vunpack.c.0.s8 %v1349
        %v1351 = vlaneseq
        %v1352 = vshrl.u32 %v1351, 7
        %v1353 = vsub.s32 %v1350, %v1352
        %v1354 = vrot.slane %v1347, %v1353
        %v1356 = vunpack.c.l.s4 1966171168
        %v1357 = vunpack.c.0.s8 %v1356
        %v1358 = vlaneseq
        %v1359 = vshrl.u32 %v1358, 7
        %v1360 = vsub.s32 %v1357, %v1359
        %v1361 = vrot.slane %v1354, %v1360
        %1363 = vst.msk [vmem:[%s567] sm:$0x3] %vm1343, %v1361
        %s1364 = sand.u32 %s314, 1
        %s1365 = scalar_lea.sflag [#allocation3], %s1364
        %s1366 = sand.u32 %s314, 1
        %s1367 = smul.addr %s1366, 32
        %s1368 = scalar_lea.vmem [#allocation2], %s1367
        %s1369 = sand.u32 %s33, 1
        %s1370 = scalar_lea.sflag [#allocation5], %s1369
        %s1371 = sand.u32 %s342, 1
        %s1372 = smul.addr %s1371, 32
        %s1373 = scalar_lea.vmem [#allocation4], %s1372
        %s1374 = sand.u32 %s33, 1
        %s1375 = scalar_lea.sflag [#allocation5], %s1374
        %s1376 = sand.u32 %s370, 1
        %s1377 = smul.addr %s1376, 2
        %s1378 = scalar_lea.vmem [#allocation6], %s1377
        %s1379 = smul.u32 2, %s38
        %p1380 = scmp.lt.s32.totalorder %s37, 1
        %s1381 = scalar_select %p1380, %s37, 1
        %p1382 = scmp.lt.s32.totalorder %s1379, 1
        %s1383 = scalar_select %p1382, %s1379, 1
        %s1384 = smul.addr %s1381, 2
        %s1385 = sadd.s32 %s1383, %s1384
        %s1386 = scalar_lea.vmem %s15, %s1385
        // Predicated region
        $region69: #{autoencoder_forward.1} parent=67 // pred_check
          %p1387 = pneg %p324
        $region70: #{autoencoder_forward.1} parent=67 // pred_check_branch
          %1389 = sbr.rel (%p1387) target = $region72
        $region71: #{autoencoder_forward.1} parent=67 // pred_region
          %s1390 = smul.u32 2, %s38
          %s1392 = ssub.s32 512, 512
          %1393 = vsyncadd %s1365, %s1392
          %s1394 = smul.addr %s37, 4
          %s1395 = sadd.s32 %s1390, %s1394
          %s1396 = smul.addr %s1395, 128
          %s1397 = scalar_lea.hbm %s12, %s1396
          %s1398 = sshll.u32 %s1368, 4
          %s1399 = int_to_ptr.vmem [resolvable:$true] %s1398
          %1404 = dma.vmem_to_hbm [thread:$0]  %s1399, 512, %s1397, %s1365, 256, 256, 16
        $region72: #{autoencoder_forward.1} parent=67 // pred_fallthru
          _
        // Predicated region
        $region73: #{autoencoder_forward.1} parent=67 // pred_check
          %p1405 = pneg %p352
        $region74: #{autoencoder_forward.1} parent=67 // pred_check_branch
          %1407 = sbr.rel (%p1405) target = $region76
        $region75: #{autoencoder_forward.1} parent=67 // pred_region
          %s1408 = smul.u32 2, %s38
          %s1410 = ssub.s32 512, 512
          %1411 = vsyncadd %s1370, %s1410
          %s1412 = smul.addr %s37, 4
          %s1413 = sadd.s32 %s1408, %s1412
          %s1414 = smul.addr %s1413, 128
          %s1415 = scalar_lea.hbm %s13, %s1414
          %s1416 = sshll.u32 %s1373, 4
          %s1417 = int_to_ptr.vmem [resolvable:$true] %s1416
          %1422 = dma.vmem_to_hbm [thread:$0]  %s1417, 512, %s1415, %s1370, 256, 256, 16
        $region76: #{autoencoder_forward.1} parent=67 // pred_fallthru
          _
        // Predicated region
        $region77: #{autoencoder_forward.1} parent=67 // pred_check
          %p1423 = pneg %p380
        $region78: #{autoencoder_forward.1} parent=67 // pred_check_branch
          %1425 = sbr.rel (%p1423) target = $region80
        $region79: #{autoencoder_forward.1} parent=67 // pred_region
          %s1426 = smul.u32 2, %s38
          %s1428 = ssub.s32 32, 32
          %1429 = vsyncadd %s1375, %s1428
          %s1430 = smul.addr %s37, 2
          %s1431 = sadd.s32 %s1426, %s1430
          %s1432 = smul.addr %s1431, 16
          %s1433 = scalar_lea.hbm %s14, %s1432
          %s1435 = sshll.u32 %s1378, 4
          %s1436 = int_to_ptr.vmem [resolvable:$true] %s1435
          %1438 = dma.vmem_to_hbm [thread:$0]  %s1436, 32, %s1433, %s1375
        $region80: #{autoencoder_forward.1} parent=67 // pred_fallthru
          _
        // Predicated region
        $region81: #{autoencoder_forward.1} parent=67 // pred_check
          %p1439 = pneg %p408
        $region82: #{autoencoder_forward.1} parent=67 // pred_check_branch
          %1441 = sbr.rel (%p1439) target = $region84
        $region83: #{autoencoder_forward.1} parent=67 // pred_region
          %s1442 = smul.u32 2, %s38
        $region84: #{autoencoder_forward.1} parent=67 // pred_fallthru
          _
      $region68: #{autoencoder_forward.1} parent=5 // pred_fallthru
        _
      %p1443 = scmp.le.s32.totalorder 2, %s28
      // Predicated region
      $region85: #{autoencoder_forward.1} parent=5 // pred_check
        %p1444 = pneg %p1443
      $region86: #{autoencoder_forward.1} parent=5 // pred_check_branch
        %1446 = sbr.rel (%p1444) target = $region88
      $region87: #{autoencoder_forward.1} parent=5 // pred_region
        %s1447 = ssub.s32 %s28, 2
        // Predicated region
        $region89: #{autoencoder_forward.1} parent=87 // pred_check
          %p1448 = pneg %p330
        $region90: #{autoencoder_forward.1} parent=87 // pred_check_branch
          %1450 = sbr.rel (%p1448) target = $region92
        $region91: #{autoencoder_forward.1} parent=87 // pred_region
          %s1451 = sand.u32 %s315, 1
          %s1452 = scalar_lea.sflag [#allocation3], %s1451
          %s1453 = sand.u32 %s315, 1
          %s1454 = smul.addr %s1453, 32
          %s1455 = scalar_lea.vmem [#allocation2], %s1454
          %1456 = dma.done %s1452, 512
        $region92: #{autoencoder_forward.1} parent=87 // pred_fallthru
          _
        // Predicated region
        $region93: #{autoencoder_forward.1} parent=87 // pred_check
          %p1457 = pneg %p358
        $region94: #{autoencoder_forward.1} parent=87 // pred_check_branch
          %1459 = sbr.rel (%p1457) target = $region96
        $region95: #{autoencoder_forward.1} parent=87 // pred_region
          %s1460 = sand.u32 %s34, 1
          %s1461 = scalar_lea.sflag [#allocation5], %s1460
          %s1462 = sand.u32 %s343, 1
          %s1463 = smul.addr %s1462, 32
          %s1464 = scalar_lea.vmem [#allocation4], %s1463
          %1465 = dma.done %s1461, 512
        $region96: #{autoencoder_forward.1} parent=87 // pred_fallthru
          _
        // Predicated region
        $region97: #{autoencoder_forward.1} parent=87 // pred_check
          %p1466 = pneg %p386
        $region98: #{autoencoder_forward.1} parent=87 // pred_check_branch
          %1468 = sbr.rel (%p1466) target = $region100
        $region99: #{autoencoder_forward.1} parent=87 // pred_region
          %s1469 = sand.u32 %s34, 1
          %s1470 = scalar_lea.sflag [#allocation5], %s1469
          %s1471 = sand.u32 %s371, 1
          %s1472 = smul.addr %s1471, 2
          %s1473 = scalar_lea.vmem [#allocation6], %s1472
          %1474 = dma.done %s1470, 32
        $region100: #{autoencoder_forward.1} parent=87 // pred_fallthru
          _
        // Predicated region
        $region101: #{autoencoder_forward.1} parent=87 // pred_check
          %p1475 = pneg %p414
        $region102: #{autoencoder_forward.1} parent=87 // pred_check_branch
          %1477 = sbr.rel (%p1475) target = $region104
        $region103: #{autoencoder_forward.1} parent=87 // pred_region
          %s1478 = smul.u32 2, %s40
          %p1479 = scmp.lt.s32.totalorder %s39, 1
          %s1480 = scalar_select %p1479, %s39, 1
          %p1481 = scmp.lt.s32.totalorder %s1478, 1
          %s1482 = scalar_select %p1481, %s1478, 1
          %s1483 = smul.addr %s1480, 2
          %s1484 = sadd.s32 %s1482, %s1483
          %s1485 = scalar_lea.vmem %s15, %s1484
        $region104: #{autoencoder_forward.1} parent=87 // pred_fallthru
          _
      $region88: #{autoencoder_forward.1} parent=5 // pred_fallthru
        _
    $region6: #{autoencoder_forward.1} parent=1 // loop_footer
      %s32 = sadd.s32 1, %s28
    $region7: #{autoencoder_forward.1} parent=1 // loop_footer_branch
      %27 = sbr.rel target = $region3
    $region8: #{autoencoder_forward.1} parent=1 // loop_exit
      _
    %1486 = vsyncpa [#allocation3], 1
    %s1487 = scalar_lea.sflag [#allocation3], 1
    %1488 = vsyncpa %s1487, 1
    %1489 = vsyncpa [#allocation5], 1
    %s1490 = scalar_lea.sflag [#allocation5], 1
    %1491 = vsyncpa %s1490, 1

</llo_original>
